<compile_context>
chip_gen: v7x
topology: tpu7x:2x2x1
jax: 0.10.0
libtpu: 0.0.40
codegen_flags: <defaults>
</compile_context>

<pallas_src>
import jax
import jax.numpy as jnp
from jax import lax
from jax.experimental import pallas as pl
from jax.experimental.pallas import tpu as pltpu

SCALE_WEIGHT = 0.5 ** 0.5


def _conv_attn_kernel(base_ref, dec_ref, w_ref, b_ref, k_ref, v_ref,
                      ctx_ref, attn_ref):
    # base_ref / dec_ref : (Bb, H, Tb)  native (batch, hidden, length) layout
    # w_ref              : (H, H)       nn.Linear weight (out, in), grid-resident
    # b_ref              : (H, 1)       nn.Linear bias as a column vector
    # k_ref / v_ref      : (Bb, H, S)   key / value, resident across T tiles
    # ctx_ref            : (Bb, H, Tb)
    # attn_ref           : (Bb, Tb, S)
    Bb = base_ref.shape[0]

    w = w_ref[...].astype(jnp.float32)      # resident; no per-step relayout
    bias = b_ref[...].astype(jnp.float32)   # (H, 1), broadcasts along Tb lanes

    # Static per-batch unroll: every step is plain 2-D MXU work in native
    # layouts (transposes folded into contraction dims, never an XLA op).
    for bb in range(Bb):
        dec_b = dec_ref[bb].astype(jnp.float32)     # (H, Tb)
        base_b = base_ref[bb].astype(jnp.float32)   # (H, Tb)
        k_b = k_ref[bb].astype(jnp.float32)         # (H, S)
        v_b = v_ref[bb].astype(jnp.float32)         # (H, S)

        # seq_linear in (H, Tb) layout: pre[o, t] = sum_h W[o, h] dec[h, t] + b[o]
        # (M = H rows per MXU call; weight stays in its native (out, in) layout.)
        pre_b = lax.dot_general(
            w, dec_b, dimension_numbers=(((1,), (0,)), ((), ())),
            preferred_element_type=jnp.float32) + bias

        target_b = (base_b + pre_b) * SCALE_WEIGHT                   # (H, Tb)

        # scores[t, s] = sum_h target[h, t] * K[h, s]    (trans-LHS matmul)
        scores = lax.dot_general(
            target_b, k_b, dimension_numbers=(((0,), (0,)), ((), ())),
            preferred_element_type=jnp.float32)                      # (Tb, S)

        # TODO(synk): optional apply_mask (masked_fill with -inf) goes here.

        # Numerically-stable softmax over source positions; exact division so
        # attention rows sum to 1 to f32 rounding (strict PyTorch parity).
        m = jnp.max(scores, axis=-1, keepdims=True)
        e = jnp.exp(scores - m)
        attn_b = e / jnp.sum(e, axis=-1, keepdims=True)              # (Tb, S)

        # ctx[h, t] = sum_s V[h, s] * attn[t, s]         (trans-RHS matmul)
        ctx_b = lax.dot_general(
            v_b, attn_b, dimension_numbers=(((1,), (1,)), ((), ())),
            preferred_element_type=jnp.float32)                      # (H, Tb)

        attn_ref[bb] = attn_b.astype(attn_ref.dtype)
        ctx_ref[bb] = ctx_b.astype(ctx_ref.dtype)


def _pick_block_b(B, cap=8):
    """Largest divisor of B that still leaves >= 2 grid steps on the batch axis
    (so v7x's two TensorCores both get work), capped at `cap` batches/step."""
    limit = min(cap, B // 2) if B >= 2 else 1
    limit = max(limit, 1)
    for d in range(limit, 0, -1):
        if B % d == 0:
            return d
    return 1


def _vmem_limit_bytes(block_b, H, block_t, S):
    """Scoped-VMEM budget: double-buffered blocks + f32 intermediates, with
    headroom, capped below the physical VMEM of the current TPU generation."""
    block_words = (2 * block_b * H * block_t      # base + dec
                   + H * H + H                    # weight + bias
                   + 2 * block_b * H * S          # key + value (resident)
                   + block_b * H * block_t        # ctx out
                   + block_b * block_t * S)       # attn out
    need = 2 * block_words * 4                    # 2-deep pipelining, f32 upper bound
    need += 6 * block_b * block_t * max(H, S) * 4  # scores/exp/attn/ctx temporaries
    cap = 48 * 1024 * 1024                        # safe default (v7x: 64 MiB physical)
    try:
        cap = int(0.75 * pltpu.get_tpu_info().vmem_capacity_bytes)
    except Exception:
        pass
    return int(min(max(2 * need, 32 * 1024 * 1024), cap))


def conv_multi_step_attention(base_target_emb, input_from_dec,
                              encoder_out_top, encoder_out_combine,
                              weight, bias, *, mask=None,
                              block_b=None, block_t=None):
    """
    Args (PyTorch layouts):
      base_target_emb:     (B, H, T, 1)
      input_from_dec:      (B, H, T, 1)
      encoder_out_top:     (B, H, S)   -- key matrix
      encoder_out_combine: (B, H, S)   -- value matrix
      weight: (H, H)  linear_in.weight  (out_features x in_features)
      bias:   (H,)    linear_in.bias
    Returns:
      context_output: (B, H, T, 1)
      attn:           (B, T, S)
    """
    if mask is not None:
        # TODO(synk): apply_mask (masked_fill -inf before softmax) not implemented.
        raise NotImplementedError("ConvMultiStepAttention mask path not implemented")

    B, H, T, W = base_target_emb.shape
    assert W == 1, "width dimension must be 1 (as in the PyTorch module)"
    S = encoder_out_top.shape[-1]
    dtype = base_target_emb.dtype

    if block_b is None:
        block_b = _pick_block_b(B)
    assert B % block_b == 0, "block_b must divide the batch size"
    if block_t is None:
        block_t = T
    assert T % block_t == 0, "block_t must divide T"
    assert block_t == T or block_t % 128 == 0, \
        "a partial T tile must be a multiple of 128 (lane-dense stores)"

    # Metadata-only layout glue (no HBM transposes): drop the width-1 axis.
    base = base_target_emb[..., 0]      # (B, H, T)
    dec = input_from_dec[..., 0]        # (B, H, T)
    bias2 = bias.reshape(H, 1)          # column vector, broadcast along T

    grid = (B // block_b, T // block_t)  # batch outer, T-tile inner (K/V resident)

    ctx, attn = pl.pallas_call(
        _conv_attn_kernel,
        out_shape=(
            jax.ShapeDtypeStruct((B, H, T), dtype),
            jax.ShapeDtypeStruct((B, T, S), dtype),
        ),
        grid_spec=pltpu.PrefetchScalarGridSpec(
            num_scalar_prefetch=0,
            grid=grid,
            in_specs=[
                pl.BlockSpec((block_b, H, block_t), lambda i, j: (i, 0, j)),  # base
                pl.BlockSpec((block_b, H, block_t), lambda i, j: (i, 0, j)),  # dec
                pl.BlockSpec((H, H), lambda i, j: (0, 0)),                    # weight
                pl.BlockSpec((H, 1), lambda i, j: (0, 0)),                    # bias
                pl.BlockSpec((block_b, H, S), lambda i, j: (i, 0, 0)),        # key
                pl.BlockSpec((block_b, H, S), lambda i, j: (i, 0, 0)),        # value
            ],
            out_specs=[
                pl.BlockSpec((block_b, H, block_t), lambda i, j: (i, 0, j)),  # context
                pl.BlockSpec((block_b, block_t, S), lambda i, j: (i, j, 0)),  # attn
            ],
        ),
        compiler_params=pltpu.CompilerParams(
            dimension_semantics=("parallel", "parallel"),
            vmem_limit_bytes=_vmem_limit_bytes(block_b, H, block_t, S)),
    )(base, dec, weight, bias2, encoder_out_top, encoder_out_combine)

    # Back to PyTorch output layout: (B, H, T) -> (B, H, T, 1) is metadata-only.
    return ctx[..., None], attn


def _reference(base_target_emb, input_from_dec, encoder_out_top,
               encoder_out_combine, weight, bias):
    """Pure-JAX f32 reference mirroring the PyTorch forward."""
    hp = jax.lax.Precision.HIGHEST
    base = base_target_emb[..., 0]                                   # (B, H, T)
    dec = input_from_dec[..., 0]                                     # (B, H, T)
    preatt = jnp.einsum("oh,bht->bot", weight, dec, precision=hp) \
        + bias[None, :, None]
    target = (base + preatt) * SCALE_WEIGHT                          # (B, H, T)
    pre_attn = jnp.einsum("bht,bhs->bts", target, encoder_out_top, precision=hp)
    attn = jax.nn.softmax(pre_attn, axis=2)
    ctx = jnp.einsum("bts,bhs->bth", attn, encoder_out_combine, precision=hp)
    context_output = jnp.transpose(ctx, (0, 2, 1))[..., None]        # (B, H, T, 1)
    return (context_output.astype(base_target_emb.dtype),
            attn.astype(base_target_emb.dtype))


if __name__ == "__main__":
    # Small but TPU-layout-friendly demo shapes:
    # batch=4, hidden (input_size)=128, target len=16, source len=128.
    B, H, T, S = 4, 128, 16, 128

    key = jax.random.PRNGKey(0)
    k1, k2, k3, k4, k5, k6 = jax.random.split(key, 6)

    base_target_emb = jax.random.normal(k1, (B, H, T, 1), dtype=jnp.float32)
    input_from_dec = jax.random.normal(k2, (B, H, T, 1), dtype=jnp.float32)
    # Scale the key matrix so the (unscaled, as in the module) scores are O(1)
    # and the softmax comparison is well conditioned.
    encoder_out_top = jax.random.normal(k3, (B, H, S), dtype=jnp.float32) * H ** -0.5
    encoder_out_combine = jax.random.normal(k4, (B, H, S), dtype=jnp.float32)

    # nn.Linear(input_size, input_size) parameters, deterministic init.
    weight = jax.random.normal(k5, (H, H), dtype=jnp.float32) * H ** -0.5
    bias = jax.random.normal(k6, (H,), dtype=jnp.float32) * 0.01

    ctx_out, attn_out = conv_multi_step_attention(
        base_target_emb, input_from_dec, encoder_out_top,
        encoder_out_combine, weight, bias)
    jax.block_until_ready((ctx_out, attn_out))

    ctx_ref, attn_ref = _reference(
        base_target_emb, input_from_dec, encoder_out_top,
        encoder_out_combine, weight, bias)

    assert ctx_out.shape == (B, H, T, 1) and attn_out.shape == (B, T, S)
    # Exact softmax -> attention rows must sum to ~1.
    assert jnp.allclose(jnp.sum(attn_out, axis=-1), 1.0, atol=1e-3)
    assert jnp.allclose(attn_out, attn_ref, atol=5e-3, rtol=5e-2)
    assert jnp.allclose(ctx_out, ctx_ref, atol=2e-2, rtol=2e-2)

    print("KERNEL_OK")
</pallas_src>

<mosaic_0001>
module attributes {stable_mosaic.version = 11 : i64} {
  func.func @_conv_attn_kernel(%arg0: i32, %arg1: i32, %arg2: memref<2x128x16xf32, #tpu.memory_space<vmem>>, %arg3: memref<2x128x16xf32, #tpu.memory_space<vmem>>, %arg4: memref<128x128xf32, #tpu.memory_space<vmem>>, %arg5: memref<128x1xf32, #tpu.memory_space<vmem>>, %arg6: memref<2x128x128xf32, #tpu.memory_space<vmem>>, %arg7: memref<2x128x128xf32, #tpu.memory_space<vmem>>, %arg8: memref<2x128x16xf32, #tpu.memory_space<vmem>>, %arg9: memref<2x16x128xf32, #tpu.memory_space<vmem>>) attributes {dimension_semantics = [#tpu.dimension_semantics<parallel>, #tpu.dimension_semantics<parallel>], iteration_bounds = array<i64: 2, 1>, scalar_prefetch = 0 : i64, scratch_operands = 0 : i64, tpu.core_type = #tpu.core_type<tc>, window_params = [{transform_indices = @transform_0, window_bounds = array<i64: 2, 128, 16>}, {transform_indices = @transform_1, window_bounds = array<i64: 2, 128, 16>}, {pipeline_mode = #tpu.pipeline_mode<synchronous>, transform_indices = @transform_2, window_bounds = array<i64: 128, 128>}, {pipeline_mode = #tpu.pipeline_mode<synchronous>, transform_indices = @transform_3, window_bounds = array<i64: 128, 1>}, {transform_indices = @transform_4, window_bounds = array<i64: 2, 128, 128>}, {transform_indices = @transform_5, window_bounds = array<i64: 2, 128, 128>}, {transform_indices = @transform_6, window_bounds = array<i64: 2, 128, 16>}, {transform_indices = @transform_7, window_bounds = array<i64: 2, 16, 128>}]} {
    %c0 = arith.constant 0 : index
    %c0_0 = arith.constant 0 : index
    %0 = vector.load %arg4[%c0, %c0_0] : memref<128x128xf32, #tpu.memory_space<vmem>>, vector<128x128xf32>
    %c0_1 = arith.constant 0 : index
    %c0_2 = arith.constant 0 : index
    %1 = vector.load %arg5[%c0_1, %c0_2] : memref<128x1xf32, #tpu.memory_space<vmem>>, vector<128x1xf32>
    %c0_3 = arith.constant 0 : index
    %c0_4 = arith.constant 0 : index
    %c0_5 = arith.constant 0 : index
    %2 = vector.load %arg3[%c0_3, %c0_4, %c0_5] : memref<2x128x16xf32, #tpu.memory_space<vmem>>, vector<1x128x16xf32>
    %3 = vector.shape_cast %2 : vector<1x128x16xf32> to vector<128x16xf32>
    %c0_6 = arith.constant 0 : index
    %c0_7 = arith.constant 0 : index
    %c0_8 = arith.constant 0 : index
    %4 = vector.load %arg2[%c0_6, %c0_7, %c0_8] : memref<2x128x16xf32, #tpu.memory_space<vmem>>, vector<1x128x16xf32>
    %5 = vector.shape_cast %4 : vector<1x128x16xf32> to vector<128x16xf32>
    %c0_9 = arith.constant 0 : index
    %c0_10 = arith.constant 0 : index
    %c0_11 = arith.constant 0 : index
    %6 = vector.load %arg6[%c0_9, %c0_10, %c0_11] : memref<2x128x128xf32, #tpu.memory_space<vmem>>, vector<1x128x128xf32>
    %7 = vector.shape_cast %6 : vector<1x128x128xf32> to vector<128x128xf32>
    %c0_12 = arith.constant 0 : index
    %c0_13 = arith.constant 0 : index
    %c0_14 = arith.constant 0 : index
    %8 = vector.load %arg7[%c0_12, %c0_13, %c0_14] : memref<2x128x128xf32, #tpu.memory_space<vmem>>, vector<1x128x128xf32>
    %9 = vector.shape_cast %8 : vector<1x128x128xf32> to vector<128x128xf32>
    %cst = arith.constant dense<0.000000e+00> : vector<128x16xf32>
    %10 = tpu.matmul %0, %3, %cst {dimension_numbers = #tpu.dot_dimension_numbers<[1], [0], [0], [1], [0, 0, 1, 1], [], []>} : vector<128x128xf32>, vector<128x16xf32>, vector<128x16xf32> -> vector<128x16xf32>
    %11 = vector.broadcast %1 : vector<128x1xf32> to vector<128x16xf32>
    %12 = arith.addf %10, %11 : vector<128x16xf32>
    %13 = arith.addf %5, %12 : vector<128x16xf32>
    %cst_15 = arith.constant 0.707106769 : f32
    %14 = vector.broadcast %cst_15 : f32 to vector<128x16xf32>
    %15 = arith.mulf %13, %14 : vector<128x16xf32>
    %cst_16 = arith.constant dense<0.000000e+00> : vector<16x128xf32>
    %16 = tpu.matmul %15, %7, %cst_16 {dimension_numbers = #tpu.dot_dimension_numbers<[0], [0], [1], [1], [0, 1, 1, 1], [], []>} : vector<128x16xf32>, vector<128x128xf32>, vector<16x128xf32> -> vector<16x128xf32>
    %cst_17 = arith.constant dense<0xFF800000> : vector<16xf32>
    %17 = vector.multi_reduction <maximumf>, %16, %cst_17 [1] : vector<16x128xf32> to vector<16xf32>
    %18 = vector.shape_cast %17 : vector<16xf32> to vector<16x1xf32>
    %19 = vector.broadcast %18 : vector<16x1xf32> to vector<16x128xf32>
    %20 = arith.subf %16, %19 : vector<16x128xf32>
    %21 = math.exp %20 : vector<16x128xf32>
    %cst_18 = arith.constant dense<0.000000e+00> : vector<16xf32>
    %22 = vector.multi_reduction <add>, %21, %cst_18 [1] : vector<16x128xf32> to vector<16xf32>
    %23 = vector.shape_cast %22 : vector<16xf32> to vector<16x1xf32>
    %24 = vector.broadcast %23 : vector<16x1xf32> to vector<16x128xf32>
    %25 = arith.divf %21, %24 : vector<16x128xf32>
    %cst_19 = arith.constant dense<0.000000e+00> : vector<128x16xf32>
    %26 = tpu.matmul %9, %25, %cst_19 {dimension_numbers = #tpu.dot_dimension_numbers<[1], [1], [0], [0], [0, 0, 1, 0], [], []>} : vector<128x128xf32>, vector<16x128xf32>, vector<128x16xf32> -> vector<128x16xf32>
    %c0_20 = arith.constant 0 : index
    %c0_21 = arith.constant 0 : index
    %c0_22 = arith.constant 0 : index
    %27 = vector.load %arg9[%c0_20, %c0_21, %c0_22] : memref<2x16x128xf32, #tpu.memory_space<vmem>>, vector<1x16x128xf32>
    %28 = vector.shape_cast %27 : vector<1x16x128xf32> to vector<16x128xf32>
    %29 = vector.shape_cast %25 : vector<16x128xf32> to vector<1x16x128xf32>
    tpu.vector_store %arg9[%c0_20, %c0_21, %c0_22], %29 {strides = array<i32>} : memref<2x16x128xf32, #tpu.memory_space<vmem>>, vector<1x16x128xf32>,
    %c0_23 = arith.constant 0 : index
    %c0_24 = arith.constant 0 : index
    %c0_25 = arith.constant 0 : index
    %30 = vector.load %arg8[%c0_23, %c0_24, %c0_25] : memref<2x128x16xf32, #tpu.memory_space<vmem>>, vector<1x128x16xf32>
    %31 = vector.shape_cast %30 : vector<1x128x16xf32> to vector<128x16xf32>
    %32 = vector.shape_cast %26 : vector<128x16xf32> to vector<1x128x16xf32>
    tpu.vector_store %arg8[%c0_23, %c0_24, %c0_25], %32 {strides = array<i32>} : memref<2x128x16xf32, #tpu.memory_space<vmem>>, vector<1x128x16xf32>,
    %c1 = arith.constant 1 : index
    %c0_26 = arith.constant 0 : index
    %c0_27 = arith.constant 0 : index
    %33 = vector.load %arg3[%c1, %c0_26, %c0_27] : memref<2x128x16xf32, #tpu.memory_space<vmem>>, vector<1x128x16xf32>
    %34 = vector.shape_cast %33 : vector<1x128x16xf32> to vector<128x16xf32>
    %c1_28 = arith.constant 1 : index
    %c0_29 = arith.constant 0 : index
    %c0_30 = arith.constant 0 : index
    %35 = vector.load %arg2[%c1_28, %c0_29, %c0_30] : memref<2x128x16xf32, #tpu.memory_space<vmem>>, vector<1x128x16xf32>
    %36 = vector.shape_cast %35 : vector<1x128x16xf32> to vector<128x16xf32>
    %c1_31 = arith.constant 1 : index
    %c0_32 = arith.constant 0 : index
    %c0_33 = arith.constant 0 : index
    %37 = vector.load %arg6[%c1_31, %c0_32, %c0_33] : memref<2x128x128xf32, #tpu.memory_space<vmem>>, vector<1x128x128xf32>
    %38 = vector.shape_cast %37 : vector<1x128x128xf32> to vector<128x128xf32>
    %c1_34 = arith.constant 1 : index
    %c0_35 = arith.constant 0 : index
    %c0_36 = arith.constant 0 : index
    %39 = vector.load %arg7[%c1_34, %c0_35, %c0_36] : memref<2x128x128xf32, #tpu.memory_space<vmem>>, vector<1x128x128xf32>
    %40 = vector.shape_cast %39 : vector<1x128x128xf32> to vector<128x128xf32>
    %cst_37 = arith.constant dense<0.000000e+00> : vector<128x16xf32>
    %41 = tpu.matmul %0, %34, %cst_37 {dimension_numbers = #tpu.dot_dimension_numbers<[1], [0], [0], [1], [0, 0, 1, 1], [], []>} : vector<128x128xf32>, vector<128x16xf32>, vector<128x16xf32> -> vector<128x16xf32>
    %42 = vector.broadcast %1 : vector<128x1xf32> to vector<128x16xf32>
    %43 = arith.addf %41, %42 : vector<128x16xf32>
    %44 = arith.addf %36, %43 : vector<128x16xf32>
    %cst_38 = arith.constant 0.707106769 : f32
    %45 = vector.broadcast %cst_38 : f32 to vector<128x16xf32>
    %46 = arith.mulf %44, %45 : vector<128x16xf32>
    %cst_39 = arith.constant dense<0.000000e+00> : vector<16x128xf32>
    %47 = tpu.matmul %46, %38, %cst_39 {dimension_numbers = #tpu.dot_dimension_numbers<[0], [0], [1], [1], [0, 1, 1, 1], [], []>} : vector<128x16xf32>, vector<128x128xf32>, vector<16x128xf32> -> vector<16x128xf32>
    %cst_40 = arith.constant dense<0xFF800000> : vector<16xf32>
    %48 = vector.multi_reduction <maximumf>, %47, %cst_40 [1] : vector<16x128xf32> to vector<16xf32>
    %49 = vector.shape_cast %48 : vector<16xf32> to vector<16x1xf32>
    %50 = vector.broadcast %49 : vector<16x1xf32> to vector<16x128xf32>
    %51 = arith.subf %47, %50 : vector<16x128xf32>
    %52 = math.exp %51 : vector<16x128xf32>
    %cst_41 = arith.constant dense<0.000000e+00> : vector<16xf32>
    %53 = vector.multi_reduction <add>, %52, %cst_41 [1] : vector<16x128xf32> to vector<16xf32>
    %54 = vector.shape_cast %53 : vector<16xf32> to vector<16x1xf32>
    %55 = vector.broadcast %54 : vector<16x1xf32> to vector<16x128xf32>
    %56 = arith.divf %52, %55 : vector<16x128xf32>
    %cst_42 = arith.constant dense<0.000000e+00> : vector<128x16xf32>
    %57 = tpu.matmul %40, %56, %cst_42 {dimension_numbers = #tpu.dot_dimension_numbers<[1], [1], [0], [0], [0, 0, 1, 0], [], []>} : vector<128x128xf32>, vector<16x128xf32>, vector<128x16xf32> -> vector<128x16xf32>
    %c1_43 = arith.constant 1 : index
    %c0_44 = arith.constant 0 : index
    %c0_45 = arith.constant 0 : index
    %58 = vector.load %arg9[%c1_43, %c0_44, %c0_45] : memref<2x16x128xf32, #tpu.memory_space<vmem>>, vector<1x16x128xf32>
    %59 = vector.shape_cast %58 : vector<1x16x128xf32> to vector<16x128xf32>
    %60 = vector.shape_cast %56 : vector<16x128xf32> to vector<1x16x128xf32>
    tpu.vector_store %arg9[%c1_43, %c0_44, %c0_45], %60 {strides = array<i32>} : memref<2x16x128xf32, #tpu.memory_space<vmem>>, vector<1x16x128xf32>,
    %c1_46 = arith.constant 1 : index
    %c0_47 = arith.constant 0 : index
    %c0_48 = arith.constant 0 : index
    %61 = vector.load %arg8[%c1_46, %c0_47, %c0_48] : memref<2x128x16xf32, #tpu.memory_space<vmem>>, vector<1x128x16xf32>
    %62 = vector.shape_cast %61 : vector<1x128x16xf32> to vector<128x16xf32>
    %63 = vector.shape_cast %57 : vector<128x16xf32> to vector<1x128x16xf32>
    tpu.vector_store %arg8[%c1_46, %c0_47, %c0_48], %63 {strides = array<i32>} : memref<2x128x16xf32, #tpu.memory_space<vmem>>, vector<1x128x16xf32>,
    return
  }
  func.func @transform_0(%arg0: i32, %arg1: i32) -> (i32, i32, i32) {
    %c0_i32 = arith.constant 0 : i32
    %c0_i32_0 = arith.constant 0 : i32
    return %arg0, %c0_i32, %arg1 : i32, i32, i32
  }
  func.func @transform_1(%arg0: i32, %arg1: i32) -> (i32, i32, i32) {
    %c0_i32 = arith.constant 0 : i32
    %c0_i32_0 = arith.constant 0 : i32
    return %arg0, %c0_i32, %arg1 : i32, i32, i32
  }
  func.func @transform_2(%arg0: i32, %arg1: i32) -> (i32, i32) {
    %c0_i32 = arith.constant 0 : i32
    %c0_i32_0 = arith.constant 0 : i32
    %c0_i32_1 = arith.constant 0 : i32
    return %c0_i32, %c0_i32_0 : i32, i32
  }
  func.func @transform_3(%arg0: i32, %arg1: i32) -> (i32, i32) {
    %c0_i32 = arith.constant 0 : i32
    %c0_i32_0 = arith.constant 0 : i32
    %c0_i32_1 = arith.constant 0 : i32
    return %c0_i32, %c0_i32_0 : i32, i32
  }
  func.func @transform_4(%arg0: i32, %arg1: i32) -> (i32, i32, i32) {
    %c0_i32 = arith.constant 0 : i32
    %c0_i32_0 = arith.constant 0 : i32
    %c0_i32_1 = arith.constant 0 : i32
    return %arg0, %c0_i32, %c0_i32_0 : i32, i32, i32
  }
  func.func @transform_5(%arg0: i32, %arg1: i32) -> (i32, i32, i32) {
    %c0_i32 = arith.constant 0 : i32
    %c0_i32_0 = arith.constant 0 : i32
    %c0_i32_1 = arith.constant 0 : i32
    return %arg0, %c0_i32, %c0_i32_0 : i32, i32, i32
  }
  func.func @transform_6(%arg0: i32, %arg1: i32) -> (i32, i32, i32) {
    %c0_i32 = arith.constant 0 : i32
    %c0_i32_0 = arith.constant 0 : i32
    return %arg0, %c0_i32, %arg1 : i32, i32, i32
  }
  func.func @transform_7(%arg0: i32, %arg1: i32) -> (i32, i32, i32) {
    %c0_i32 = arith.constant 0 : i32
    %c0_i32_0 = arith.constant 0 : i32
    return %arg0, %arg1, %c0_i32 : i32, i32, i32
  }
}

</mosaic_0001>

<llo_original>
// kernel: tpu_custom_call.1
$region0: #{tpu_custom_call.1}
  #allocation0 [shape = 'u32[]', space=smem, size = 0x4, offset = 0x4, fixed_abs, tag = 'smem constant byte address 0x4 - core index']
  #allocation1 [shape = 'u32[144,128]{1,0:T(1,128)}', space=vmem, size = 0x12000, scoped, tag = 'internal scratch']
  %s0 = inlined_call_operand.vmem [shape: f32[4,128,16], index: 0, kind: input, shape index: {}]
  %s1 = inlined_call_operand.vmem [shape: f32[4,128,16], index: 1, kind: input, shape index: {}]
  %s2 = inlined_call_operand.vmem [shape: f32[128,128], index: 2, kind: input, shape index: {}]
  %s3 = inlined_call_operand.vmem [shape: f32[128,1], index: 3, kind: input, shape index: {}]
  %s4 = inlined_call_operand.vmem [shape: f32[4,128,128], index: 4, kind: input, shape index: {}]
  %s5 = inlined_call_operand.vmem [shape: f32[4,128,128], index: 5, kind: input, shape index: {}]
  %s6 = inlined_call_operand.vmem [shape: f32[4,128,16], index: 6, kind: output, shape index: {0}]
  %s7 = inlined_call_operand.hbm [shape: f32[4,16,128], index: 7, kind: output, shape index: {1}]
  %8 = xla_tuple %s6, %s7
  %s9 = sld [smem:[#allocation0]]
  $region65: #{tpu_custom_call.1} parent=0
    _
  %s11 = ssub.s32 1, %s9
  %s12 = scalar_select 0, %s11, %s9
  $region1: #{tpu_custom_call.1} parent=0
    #allocation2 [shape = 'u8[32768]{0}', space=vmem, size = 0x8000, scoped, tag = 'output window, operand 1']
    #allocation3 [shape = 's32[2]{0}', space=sflag, size = 0x8, scoped, tag = 'scoped memory for tpu_custom_call.1']
    %13 = vsyncpa [#allocation3], 0
    %s14 = scalar_lea.sflag [#allocation3], 1
    %15 = vsyncpa %s14, 0
    loop: start=0, step=1, limit=4
    $region2: #{tpu_custom_call.1} parent=1 // loop_pre_header
      _
    $region3: #{tpu_custom_call.1} parent=1 // loop_header
      %s17 = sphi 0, %s21
      %p18 = scmp.ge.s32.totalorder %s17, 4
      %s24 = sphi 0, %s36
      %s25 = sphi 0, %s32
      %s26 = sphi 0, %s24
      %s27 = sphi 0, %s25
      %s28 = sphi 0, %s26
      %s29 = sphi 0, %s27
      %s41 = sphi 0, %s43
      %s44 = sphi 0, %s41
      %s45 = sphi 0, %s44
      %s61 = sphi 0, %s45
      %s69 = sphi 0, %s71
      %s72 = sphi 0, %s69
      %s73 = sphi 0, %s72
      %s89 = sphi 0, %s73
      %s93 = sphi 0, %s93
      %s95 = sphi 0, %s93
      %s96 = sphi 0, %s95
      %s110 = sphi 0, %s96
      %s114 = sphi 0, %s114
      %s116 = sphi 0, %s114
      %s117 = sphi 0, %s116
      %s131 = sphi 0, %s117
      %s137 = sphi 0, %s139
      %s140 = sphi 0, %s137
      %s141 = sphi 0, %s140
      %s157 = sphi 0, %s141
      %s163 = sphi 0, %s165
      %s166 = sphi 0, %s163
      %s167 = sphi 0, %s166
      %s183 = sphi 0, %s167
      %s191 = sphi 0, %s193
      %s194 = sphi 0, %s191
      %s195 = sphi 0, %s194
      %s211 = sphi 0, %s195
      %s219 = sphi 0, %s221
      %s222 = sphi 0, %s219
      %s223 = sphi 0, %s222
      %s239 = sphi 0, %s223
    $region4: #{tpu_custom_call.1} parent=1 // loop_header_branch
      %20 = sbr.rel (%p18) target = $region8
    $region5: #{tpu_custom_call.1} parent=1 // loop_body
      %s22 = ssub.s32 %s17, 1
      %s23 = ssub.s32 %s17, 2
      %s30 = sadd.s32 1, %s25
      %p31 = scmp.ge.s32.totalorder %s30, 1
      %s32 = scalar_select %p31, 0, %s30
      %s33 = sadd.s32 1, %s24
      %s34 = scalar_select %p31, %s33, %s24
      %p35 = scmp.ge.s32.totalorder %s34, 2
      %s36 = scalar_select %p35, 0, %s34
      %s37 = ssub.s32 %s24, %s36
      %s38 = ssub.s32 %s25, %s32
      %s39 = sor.u32 %s37, %s38
      %p40 = scmp.eq.s32.totalorder %s39, 0
      %s42 = sadd.s32 %s41, 1
      %s43 = scalar_select %p40, %s41, %s42
      %p46 = pneg %p40
      %p47 = scmp.eq.s32.totalorder %s17, 1
      %p48 = por %p46, %p47
      %p49 = scmp.ne.s32.totalorder %s41, %s44
      %p50 = scmp.eq.s32.totalorder %s17, 0
      %p51 = por %p49, %p50
      %p52 = scmp.ne.s32.totalorder %s41, %s44
      %p53 = scmp.eq.s32.totalorder %s22, 1
      %p54 = por %p52, %p53
      %p55 = scmp.ne.s32.totalorder %s44, %s45
      %p56 = scmp.eq.s32.totalorder %s22, 0
      %p57 = por %p55, %p56
      %p58 = scmp.ne.s32.totalorder %s44, %s45
      %p59 = scmp.eq.s32.totalorder %s23, 1
      %p60 = por %p58, %p59
      %p62 = scmp.ne.s32.totalorder %s45, %s61
      %p63 = scmp.eq.s32.totalorder %s23, 0
      %p64 = por %p62, %p63
      %s65 = ssub.s32 %s24, %s36
      %s66 = ssub.s32 %s25, %s32
      %s67 = sor.u32 %s65, %s66
      %p68 = scmp.eq.s32.totalorder %s67, 0
      %s70 = sadd.s32 %s69, 1
      %s71 = scalar_select %p68, %s69, %s70
      %p74 = pneg %p68
      %p75 = scmp.eq.s32.totalorder %s17, 1
      %p76 = por %p74, %p75
      %p77 = scmp.ne.s32.totalorder %s69, %s72
      %p78 = scmp.eq.s32.totalorder %s17, 0
      %p79 = por %p77, %p78
      %p80 = scmp.ne.s32.totalorder %s69, %s72
      %p81 = scmp.eq.s32.totalorder %s22, 1
      %p82 = por %p80, %p81
      %p83 = scmp.ne.s32.totalorder %s72, %s73
      %p84 = scmp.eq.s32.totalorder %s22, 0
      %p85 = por %p83, %p84
      %p86 = scmp.ne.s32.totalorder %s72, %s73
      %p87 = scmp.eq.s32.totalorder %s23, 1
      %p88 = por %p86, %p87
      %p90 = scmp.ne.s32.totalorder %s73, %s89
      %p91 = scmp.eq.s32.totalorder %s23, 0
      %p92 = por %p90, %p91
      %s94 = sadd.s32 %s93, 1
      %p97 = scmp.eq.s32.totalorder %s17, 1
      %p98 = scmp.ne.s32.totalorder %s93, %s95
      %p99 = scmp.eq.s32.totalorder %s17, 0
      %p100 = por %p98, %p99
      %p101 = scmp.ne.s32.totalorder %s93, %s95
      %p102 = scmp.eq.s32.totalorder %s22, 1
      %p103 = por %p101, %p102
      %p104 = scmp.ne.s32.totalorder %s95, %s96
      %p105 = scmp.eq.s32.totalorder %s22, 0
      %p106 = por %p104, %p105
      %p107 = scmp.ne.s32.totalorder %s95, %s96
      %p108 = scmp.eq.s32.totalorder %s23, 1
      %p109 = por %p107, %p108
      %p111 = scmp.ne.s32.totalorder %s96, %s110
      %p112 = scmp.eq.s32.totalorder %s23, 0
      %p113 = por %p111, %p112
      %s115 = sadd.s32 %s114, 1
      %p118 = scmp.eq.s32.totalorder %s17, 1
      %p119 = scmp.ne.s32.totalorder %s114, %s116
      %p120 = scmp.eq.s32.totalorder %s17, 0
      %p121 = por %p119, %p120
      %p122 = scmp.ne.s32.totalorder %s114, %s116
      %p123 = scmp.eq.s32.totalorder %s22, 1
      %p124 = por %p122, %p123
      %p125 = scmp.ne.s32.totalorder %s116, %s117
      %p126 = scmp.eq.s32.totalorder %s22, 0
      %p127 = por %p125, %p126
      %p128 = scmp.ne.s32.totalorder %s116, %s117
      %p129 = scmp.eq.s32.totalorder %s23, 1
      %p130 = por %p128, %p129
      %p132 = scmp.ne.s32.totalorder %s117, %s131
      %p133 = scmp.eq.s32.totalorder %s23, 0
      %p134 = por %p132, %p133
      %s135 = ssub.s32 %s24, %s36
      %p136 = scmp.eq.s32.totalorder %s135, 0
      %s138 = sadd.s32 %s137, 1
      %s139 = scalar_select %p136, %s137, %s138
      %p142 = pneg %p136
      %p143 = scmp.eq.s32.totalorder %s17, 1
      %p144 = por %p142, %p143
      %p145 = scmp.ne.s32.totalorder %s137, %s140
      %p146 = scmp.eq.s32.totalorder %s17, 0
      %p147 = por %p145, %p146
      %p148 = scmp.ne.s32.totalorder %s137, %s140
      %p149 = scmp.eq.s32.totalorder %s22, 1
      %p150 = por %p148, %p149
      %p151 = scmp.ne.s32.totalorder %s140, %s141
      %p152 = scmp.eq.s32.totalorder %s22, 0
      %p153 = por %p151, %p152
      %p154 = scmp.ne.s32.totalorder %s140, %s141
      %p155 = scmp.eq.s32.totalorder %s23, 1
      %p156 = por %p154, %p155
      %p158 = scmp.ne.s32.totalorder %s141, %s157
      %p159 = scmp.eq.s32.totalorder %s23, 0
      %p160 = por %p158, %p159
      %s161 = ssub.s32 %s24, %s36
      %p162 = scmp.eq.s32.totalorder %s161, 0
      %s164 = sadd.s32 %s163, 1
      %s165 = scalar_select %p162, %s163, %s164
      %p168 = pneg %p162
      %p169 = scmp.eq.s32.totalorder %s17, 1
      %p170 = por %p168, %p169
      %p171 = scmp.ne.s32.totalorder %s163, %s166
      %p172 = scmp.eq.s32.totalorder %s17, 0
      %p173 = por %p171, %p172
      %p174 = scmp.ne.s32.totalorder %s163, %s166
      %p175 = scmp.eq.s32.totalorder %s22, 1
      %p176 = por %p174, %p175
      %p177 = scmp.ne.s32.totalorder %s166, %s167
      %p178 = scmp.eq.s32.totalorder %s22, 0
      %p179 = por %p177, %p178
      %p180 = scmp.ne.s32.totalorder %s166, %s167
      %p181 = scmp.eq.s32.totalorder %s23, 1
      %p182 = por %p180, %p181
      %p184 = scmp.ne.s32.totalorder %s167, %s183
      %p185 = scmp.eq.s32.totalorder %s23, 0
      %p186 = por %p184, %p185
      %s187 = ssub.s32 %s24, %s36
      %s188 = ssub.s32 %s25, %s32
      %s189 = sor.u32 %s187, %s188
      %p190 = scmp.eq.s32.totalorder %s189, 0
      %s192 = sadd.s32 %s191, 1
      %s193 = scalar_select %p190, %s191, %s192
      %p196 = pneg %p190
      %p197 = scmp.eq.s32.totalorder %s17, 1
      %p198 = por %p196, %p197
      %p199 = scmp.ne.s32.totalorder %s191, %s194
      %p200 = scmp.eq.s32.totalorder %s17, 0
      %p201 = por %p199, %p200
      %p202 = scmp.ne.s32.totalorder %s191, %s194
      %p203 = scmp.eq.s32.totalorder %s22, 1
      %p204 = por %p202, %p203
      %p205 = scmp.ne.s32.totalorder %s194, %s195
      %p206 = scmp.eq.s32.totalorder %s22, 0
      %p207 = por %p205, %p206
      %p208 = scmp.ne.s32.totalorder %s194, %s195
      %p209 = scmp.eq.s32.totalorder %s23, 1
      %p210 = por %p208, %p209
      %p212 = scmp.ne.s32.totalorder %s195, %s211
      %p213 = scmp.eq.s32.totalorder %s23, 0
      %p214 = por %p212, %p213
      %s215 = ssub.s32 %s24, %s36
      %s216 = ssub.s32 %s25, %s32
      %s217 = sor.u32 %s215, %s216
      %p218 = scmp.eq.s32.totalorder %s217, 0
      %s220 = sadd.s32 %s219, 1
      %s221 = scalar_select %p218, %s219, %s220
      %p224 = pneg %p218
      %p225 = scmp.eq.s32.totalorder %s17, 1
      %p226 = por %p224, %p225
      %p227 = scmp.ne.s32.totalorder %s219, %s222
      %p228 = scmp.eq.s32.totalorder %s17, 0
      %p229 = por %p227, %p228
      %p230 = scmp.ne.s32.totalorder %s219, %s222
      %p231 = scmp.eq.s32.totalorder %s22, 1
      %p232 = por %p230, %p231
      %p233 = scmp.ne.s32.totalorder %s222, %s223
      %p234 = scmp.eq.s32.totalorder %s22, 0
      %p235 = por %p233, %p234
      %p236 = scmp.ne.s32.totalorder %s222, %s223
      %p237 = scmp.eq.s32.totalorder %s23, 1
      %p238 = por %p236, %p237
      %p240 = scmp.ne.s32.totalorder %s223, %s239
      %p241 = scmp.eq.s32.totalorder %s23, 0
      %p242 = por %p240, %p241
      %p243 = scmp.le.s32.totalorder 1, %s17
      %p244 = scmp.lt.s32.totalorder %s17, 3
      %p245 = pnand %p243, %p244
      %p246 = pneg %p245
      // Predicated region
      $region9: #{tpu_custom_call.1} parent=5 // pred_check
        _
      $region10: #{tpu_custom_call.1} parent=5 // pred_check_branch
        %248 = sbr.rel (%p245) target = $region12
      $region11: #{tpu_custom_call.1} parent=5 // pred_region
        %s249 = ssub.s32 %s17, 1
        // Predicated region
        $region13: #{tpu_custom_call.1} parent=11 // pred_check
          %p250 = pneg %p106
        $region14: #{tpu_custom_call.1} parent=11 // pred_check_branch
          %252 = sbr.rel (%p250) target = $region16
        $region15: #{tpu_custom_call.1} parent=11 // pred_region
          _
        $region16: #{tpu_custom_call.1} parent=11 // pred_fallthru
          _
        // Predicated region
        $region17: #{tpu_custom_call.1} parent=11 // pred_check
          %p253 = pneg %p127
        $region18: #{tpu_custom_call.1} parent=11 // pred_check_branch
          %255 = sbr.rel (%p253) target = $region20
        $region19: #{tpu_custom_call.1} parent=11 // pred_region
          _
        $region20: #{tpu_custom_call.1} parent=11 // pred_fallthru
          _
      $region12: #{tpu_custom_call.1} parent=5 // pred_fallthru
        _
      %p256 = scmp.lt.s32.totalorder %s17, 2
      // Predicated region
      $region21: #{tpu_custom_call.1} parent=5 // pred_check
        %p257 = pneg %p256
      $region22: #{tpu_custom_call.1} parent=5 // pred_check_branch
        %259 = sbr.rel (%p257) target = $region24
      $region23: #{tpu_custom_call.1} parent=5 // pred_region
        // Predicated region
        $region25: #{tpu_custom_call.1} parent=23 // pred_check
          %p260 = pneg %p51
        $region26: #{tpu_custom_call.1} parent=23 // pred_check_branch
          %262 = sbr.rel (%p260) target = $region28
        $region27: #{tpu_custom_call.1} parent=23 // pred_region
          %s263 = smul.u32 2, %s24
          %p264 = scmp.lt.s32.totalorder %s263, 3
          %s265 = scalar_select %p264, %s263, 3
          %p266 = scmp.lt.s32.totalorder %s25, 0
          %s267 = scalar_select %p266, %s25, 0
          %s268 = smul.addr %s265, 16
          %s269 = sadd.s32 %s267, %s268
          %s270 = smul.addr %s269, 8
          %s271 = scalar_lea.vmem %s0, %s270
          %s272 = smul.u32 2, %s24
        $region28: #{tpu_custom_call.1} parent=23 // pred_fallthru
          _
        // Predicated region
        $region29: #{tpu_custom_call.1} parent=23 // pred_check
          %p273 = pneg %p79
        $region30: #{tpu_custom_call.1} parent=23 // pred_check_branch
          %275 = sbr.rel (%p273) target = $region32
        $region31: #{tpu_custom_call.1} parent=23 // pred_region
          %s276 = smul.u32 2, %s24
          %p277 = scmp.lt.s32.totalorder %s276, 3
          %s278 = scalar_select %p277, %s276, 3
          %p279 = scmp.lt.s32.totalorder %s25, 0
          %s280 = scalar_select %p279, %s25, 0
          %s281 = smul.addr %s278, 16
          %s282 = sadd.s32 %s280, %s281
          %s283 = smul.addr %s282, 8
          %s284 = scalar_lea.vmem %s1, %s283
          %s285 = smul.u32 2, %s24
        $region32: #{tpu_custom_call.1} parent=23 // pred_fallthru
          _
        // Predicated region
        $region33: #{tpu_custom_call.1} parent=23 // pred_check
          %p286 = pneg %p147
        $region34: #{tpu_custom_call.1} parent=23 // pred_check_branch
          %288 = sbr.rel (%p286) target = $region36
        $region35: #{tpu_custom_call.1} parent=23 // pred_region
          %s289 = smul.u32 2, %s24
          %p290 = scmp.lt.s32.totalorder %s289, 3
          %s291 = scalar_select %p290, %s289, 3
          %s292 = smul.addr %s291, 16
          %s293 = smul.addr %s292, 8
          %s294 = scalar_lea.vmem %s4, %s293
          %s295 = smul.u32 2, %s24
        $region36: #{tpu_custom_call.1} parent=23 // pred_fallthru
          _
        // Predicated region
        $region37: #{tpu_custom_call.1} parent=23 // pred_check
          %p296 = pneg %p173
        $region38: #{tpu_custom_call.1} parent=23 // pred_check_branch
          %298 = sbr.rel (%p296) target = $region40
        $region39: #{tpu_custom_call.1} parent=23 // pred_region
          %s299 = smul.u32 2, %s24
          %p300 = scmp.lt.s32.totalorder %s299, 3
          %s301 = scalar_select %p300, %s299, 3
          %s302 = smul.addr %s301, 16
          %s303 = smul.addr %s302, 8
          %s304 = scalar_lea.vmem %s5, %s303
          %s305 = smul.u32 2, %s24
        $region40: #{tpu_custom_call.1} parent=23 // pred_fallthru
          _
      $region24: #{tpu_custom_call.1} parent=5 // pred_fallthru
        _
      %p306 = scmp.le.s32.totalorder 1, %s17
      %p307 = scmp.lt.s32.totalorder %s17, 3
      %p308 = pnand %p306, %p307
      %p309 = pneg %p308
      // Predicated region
      $region41: #{tpu_custom_call.1} parent=5 // pred_check
        _
      $region42: #{tpu_custom_call.1} parent=5 // pred_check_branch
        %311 = sbr.rel (%p308) target = $region44
      $region43: #{tpu_custom_call.1} parent=5 // pred_region
        %s312 = ssub.s32 %s17, 1
        %s313 = smul.u32 2, %s26
        %p314 = scmp.lt.s32.totalorder %s313, 3
        %s315 = scalar_select %p314, %s313, 3
        %p316 = scmp.lt.s32.totalorder %s27, 0
        %s317 = scalar_select %p316, %s27, 0
        %s318 = smul.addr %s315, 16
        %s319 = sadd.s32 %s317, %s318
        %s320 = smul.addr %s319, 8
        %s321 = scalar_lea.vmem %s0, %s320
        %p322 = pneg %p57
        %p323 = pneg %p54
        %s324 = smul.u32 2, %s26
        %p325 = scmp.lt.s32.totalorder %s324, 3
        %s326 = scalar_select %p325, %s324, 3
        %p327 = scmp.lt.s32.totalorder %s27, 0
        %s328 = scalar_select %p327, %s27, 0
        %s329 = smul.addr %s326, 16
        %s330 = sadd.s32 %s328, %s329
        %s331 = smul.addr %s330, 8
        %s332 = scalar_lea.vmem %s1, %s331
        %p333 = pneg %p85
        %p334 = pneg %p82
        %p335 = pneg %p106
        %p336 = pneg %p103
        %p337 = pneg %p127
        %p338 = pneg %p124
        %s339 = smul.u32 2, %s26
        %p340 = scmp.lt.s32.totalorder %s339, 3
        %s341 = scalar_select %p340, %s339, 3
        %s342 = smul.addr %s341, 16
        %s343 = smul.addr %s342, 8
        %s344 = scalar_lea.vmem %s4, %s343
        %p345 = pneg %p153
        %p346 = pneg %p150
        %s347 = smul.u32 2, %s26
        %p348 = scmp.lt.s32.totalorder %s347, 3
        %s349 = scalar_select %p348, %s347, 3
        %s350 = smul.addr %s349, 16
        %s351 = smul.addr %s350, 8
        %s352 = scalar_lea.vmem %s5, %s351
        %p353 = pneg %p179
        %p354 = pneg %p176
        %p355 = pneg %p207
        %p356 = pneg %p204
        %s357 = smul.u32 2, %s26
        %p358 = scmp.lt.s32.totalorder %s357, 3
        %s359 = scalar_select %p358, %s357, 3
        %p360 = scmp.lt.s32.totalorder %s27, 0
        %s361 = scalar_select %p360, %s27, 0
        %s362 = smul.addr %s359, 16
        %s363 = sadd.s32 %s361, %s362
        %s364 = smul.addr %s363, 8
        %s365 = scalar_lea.vmem %s6, %s364
        %p366 = pneg %p235
        %p367 = pneg %p232
        %s368 = sand.u32 %s222, 1
        %s369 = scalar_lea.sflag [#allocation3], %s368
        %s370 = sand.u32 %s222, 1
        %s371 = smul.addr %s370, 32
        %s372 = scalar_lea.vmem [#allocation2], %s371
        %s373 = smul.u32 2, %s26
        %p374 = scmp.lt.s32.totalorder %s373, 3
        %s375 = scalar_select %p374, %s373, 3
        %p376 = scmp.lt.s32.totalorder %s27, 0
        %s377 = scalar_select %p376, %s27, 0
        %s378 = smul.addr %s375, 16
        %s379 = sadd.s32 %s377, %s378
        %s380 = smul.addr %s379, 8
        %s381 = scalar_lea.vmem %s0, %s380
        %s382 = smul.u32 2, %s26
        %s383 = smul.u32 2, %s26
        %p384 = scmp.lt.s32.totalorder %s383, 3
        %s385 = scalar_select %p384, %s383, 3
        %p386 = scmp.lt.s32.totalorder %s27, 0
        %s387 = scalar_select %p386, %s27, 0
        %s388 = smul.addr %s385, 16
        %s389 = sadd.s32 %s387, %s388
        %s390 = smul.addr %s389, 8
        %s391 = scalar_lea.vmem %s1, %s390
        %s392 = smul.u32 2, %s26
        %s393 = smul.u32 2, %s26
        %p394 = scmp.lt.s32.totalorder %s393, 3
        %s395 = scalar_select %p394, %s393, 3
        %s396 = smul.addr %s395, 16
        %s397 = smul.addr %s396, 8
        %s398 = scalar_lea.vmem %s4, %s397
        %s399 = smul.u32 2, %s26
        %s400 = smul.u32 2, %s26
        %p401 = scmp.lt.s32.totalorder %s400, 3
        %s402 = scalar_select %p401, %s400, 3
        %s403 = smul.addr %s402, 16
        %s404 = smul.addr %s403, 8
        %s405 = scalar_lea.vmem %s5, %s404
        %s406 = smul.u32 2, %s26
        %s407 = smul.u32 2, %s26
        %p408 = scmp.lt.s32.totalorder %s407, 3
        %s409 = scalar_select %p408, %s407, 3
        %p410 = scmp.lt.s32.totalorder %s27, 0
        %s411 = scalar_select %p410, %s27, 0
        %s412 = smul.addr %s409, 16
        %s413 = sadd.s32 %s411, %s412
        %s414 = smul.addr %s413, 8
        %s415 = scalar_lea.vmem %s6, %s414
        %s416 = smul.u32 2, %s26
        %s417 = smul.u32 2, %s26
        %s418 = smul.u32 2, %s27
        %v419 = vld [vmem:[%s2] sm:$0xff]
        %v420 = vld [vmem:[%s2 + $0x8] sm:$0xff]
        %v421 = vld [vmem:[%s2 + $0x10] sm:$0xff]
        %v422 = vld [vmem:[%s2 + $0x18] sm:$0xff]
        %v423 = vld [vmem:[%s2 + $0x20] sm:$0xff]
        %v424 = vld [vmem:[%s2 + $0x28] sm:$0xff]
        %v425 = vld [vmem:[%s2 + $0x30] sm:$0xff]
        %v426 = vld [vmem:[%s2 + $0x38] sm:$0xff]
        %v427 = vld [vmem:[%s2 + $0x40] sm:$0xff]
        %v428 = vld [vmem:[%s2 + $0x48] sm:$0xff]
        %v429 = vld [vmem:[%s2 + $0x50] sm:$0xff]
        %v430 = vld [vmem:[%s2 + $0x58] sm:$0xff]
        %v431 = vld [vmem:[%s2 + $0x60] sm:$0xff]
        %v432 = vld [vmem:[%s2 + $0x68] sm:$0xff]
        %v433 = vld [vmem:[%s2 + $0x70] sm:$0xff]
        %v434 = vld [vmem:[%s2 + $0x78] sm:$0xff]
        %v435 = vld [vmem:[%s3] sm:$0xff]
        %v436 = vld [vmem:[%s3 + $0x8] sm:$0xff]
        %v437 = vld [vmem:[%s3 + $0x10] sm:$0xff]
        %v438 = vld [vmem:[%s3 + $0x18] sm:$0xff]
        %v439 = vld [vmem:[%s3 + $0x20] sm:$0xff]
        %v440 = vld [vmem:[%s3 + $0x28] sm:$0xff]
        %v441 = vld [vmem:[%s3 + $0x30] sm:$0xff]
        %v442 = vld [vmem:[%s3 + $0x38] sm:$0xff]
        %v443 = vld [vmem:[%s3 + $0x40] sm:$0xff]
        %v444 = vld [vmem:[%s3 + $0x48] sm:$0xff]
        %v445 = vld [vmem:[%s3 + $0x50] sm:$0xff]
        %v446 = vld [vmem:[%s3 + $0x58] sm:$0xff]
        %v447 = vld [vmem:[%s3 + $0x60] sm:$0xff]
        %v448 = vld [vmem:[%s3 + $0x68] sm:$0xff]
        %v449 = vld [vmem:[%s3 + $0x70] sm:$0xff]
        %v450 = vld [vmem:[%s3 + $0x78] sm:$0xff]
        %v451 = vld [vmem:[%s391] sm:$0xff]
        %v452 = vld [vmem:[%s391 + $0x8] sm:$0xff]
        %v453 = vld [vmem:[%s391 + $0x10] sm:$0xff]
        %v454 = vld [vmem:[%s391 + $0x18] sm:$0xff]
        %v455 = vld [vmem:[%s391 + $0x20] sm:$0xff]
        %v456 = vld [vmem:[%s391 + $0x28] sm:$0xff]
        %v457 = vld [vmem:[%s391 + $0x30] sm:$0xff]
        %v458 = vld [vmem:[%s391 + $0x38] sm:$0xff]
        %v459 = vld [vmem:[%s391 + $0x40] sm:$0xff]
        %v460 = vld [vmem:[%s391 + $0x48] sm:$0xff]
        %v461 = vld [vmem:[%s391 + $0x50] sm:$0xff]
        %v462 = vld [vmem:[%s391 + $0x58] sm:$0xff]
        %v463 = vld [vmem:[%s391 + $0x60] sm:$0xff]
        %v464 = vld [vmem:[%s391 + $0x68] sm:$0xff]
        %v465 = vld [vmem:[%s391 + $0x70] sm:$0xff]
        %v466 = vld [vmem:[%s391 + $0x78] sm:$0xff]
        %v467 = vld [vmem:[%s381] sm:$0xff]
        %v468 = vld [vmem:[%s381 + $0x8] sm:$0xff]
        %v469 = vld [vmem:[%s381 + $0x10] sm:$0xff]
        %v470 = vld [vmem:[%s381 + $0x18] sm:$0xff]
        %v471 = vld [vmem:[%s381 + $0x20] sm:$0xff]
        %v472 = vld [vmem:[%s381 + $0x28] sm:$0xff]
        %v473 = vld [vmem:[%s381 + $0x30] sm:$0xff]
        %v474 = vld [vmem:[%s381 + $0x38] sm:$0xff]
        %v475 = vld [vmem:[%s381 + $0x40] sm:$0xff]
        %v476 = vld [vmem:[%s381 + $0x48] sm:$0xff]
        %v477 = vld [vmem:[%s381 + $0x50] sm:$0xff]
        %v478 = vld [vmem:[%s381 + $0x58] sm:$0xff]
        %v479 = vld [vmem:[%s381 + $0x60] sm:$0xff]
        %v480 = vld [vmem:[%s381 + $0x68] sm:$0xff]
        %v481 = vld [vmem:[%s381 + $0x70] sm:$0xff]
        %v482 = vld [vmem:[%s381 + $0x78] sm:$0xff]
        %v483 = vld [vmem:[%s398] sm:$0xff]
        %v484 = vld [vmem:[%s398 + $0x8] sm:$0xff]
        %v485 = vld [vmem:[%s398 + $0x10] sm:$0xff]
        %v486 = vld [vmem:[%s398 + $0x18] sm:$0xff]
        %v487 = vld [vmem:[%s398 + $0x20] sm:$0xff]
        %v488 = vld [vmem:[%s398 + $0x28] sm:$0xff]
        %v489 = vld [vmem:[%s398 + $0x30] sm:$0xff]
        %v490 = vld [vmem:[%s398 + $0x38] sm:$0xff]
        %v491 = vld [vmem:[%s398 + $0x40] sm:$0xff]
        %v492 = vld [vmem:[%s398 + $0x48] sm:$0xff]
        %v493 = vld [vmem:[%s398 + $0x50] sm:$0xff]
        %v494 = vld [vmem:[%s398 + $0x58] sm:$0xff]
        %v495 = vld [vmem:[%s398 + $0x60] sm:$0xff]
        %v496 = vld [vmem:[%s398 + $0x68] sm:$0xff]
        %v497 = vld [vmem:[%s398 + $0x70] sm:$0xff]
        %v498 = vld [vmem:[%s398 + $0x78] sm:$0xff]
        %v499 = vld [vmem:[%s405] sm:$0xff]
        %v500 = vld [vmem:[%s405 + $0x8] sm:$0xff]
        %v501 = vld [vmem:[%s405 + $0x10] sm:$0xff]
        %v502 = vld [vmem:[%s405 + $0x18] sm:$0xff]
        %v503 = vld [vmem:[%s405 + $0x20] sm:$0xff]
        %v504 = vld [vmem:[%s405 + $0x28] sm:$0xff]
        %v505 = vld [vmem:[%s405 + $0x30] sm:$0xff]
        %v506 = vld [vmem:[%s405 + $0x38] sm:$0xff]
        %v507 = vld [vmem:[%s405 + $0x40] sm:$0xff]
        %v508 = vld [vmem:[%s405 + $0x48] sm:$0xff]
        %v509 = vld [vmem:[%s405 + $0x50] sm:$0xff]
        %v510 = vld [vmem:[%s405 + $0x58] sm:$0xff]
        %v511 = vld [vmem:[%s405 + $0x60] sm:$0xff]
        %v512 = vld [vmem:[%s405 + $0x68] sm:$0xff]
        %v513 = vld [vmem:[%s405 + $0x70] sm:$0xff]
        %v514 = vld [vmem:[%s405 + $0x78] sm:$0xff]
        %516 = vset.pattern.permute.xlu0 0
        %517 = vperm.xlu0 %516, %v435
        %v518 = vpop.permute.xlu0 %517
        %521 = vset.pattern.permute.xlu0 0
        %522 = vperm.xlu0 %521, %v436
        %v523 = vpop.permute.xlu0 %522
        %526 = vset.pattern.permute.xlu0 0
        %527 = vperm.xlu0 %526, %v437
        %v528 = vpop.permute.xlu0 %527
        %531 = vset.pattern.permute.xlu0 0
        %532 = vperm.xlu0 %531, %v438
        %v533 = vpop.permute.xlu0 %532
        %536 = vset.pattern.permute.xlu0 0
        %537 = vperm.xlu0 %536, %v439
        %v538 = vpop.permute.xlu0 %537
        %541 = vset.pattern.permute.xlu0 0
        %542 = vperm.xlu0 %541, %v440
        %v543 = vpop.permute.xlu0 %542
        %546 = vset.pattern.permute.xlu0 0
        %547 = vperm.xlu0 %546, %v441
        %v548 = vpop.permute.xlu0 %547
        %551 = vset.pattern.permute.xlu0 0
        %552 = vperm.xlu0 %551, %v442
        %v553 = vpop.permute.xlu0 %552
        %556 = vset.pattern.permute.xlu0 0
        %557 = vperm.xlu0 %556, %v443
        %v558 = vpop.permute.xlu0 %557
        %561 = vset.pattern.permute.xlu0 0
        %562 = vperm.xlu0 %561, %v444
        %v563 = vpop.permute.xlu0 %562
        %566 = vset.pattern.permute.xlu0 0
        %567 = vperm.xlu0 %566, %v445
        %v568 = vpop.permute.xlu0 %567
        %571 = vset.pattern.permute.xlu0 0
        %572 = vperm.xlu0 %571, %v446
        %v573 = vpop.permute.xlu0 %572
        %576 = vset.pattern.permute.xlu0 0
        %577 = vperm.xlu0 %576, %v447
        %v578 = vpop.permute.xlu0 %577
        %581 = vset.pattern.permute.xlu0 0
        %582 = vperm.xlu0 %581, %v448
        %v583 = vpop.permute.xlu0 %582
        %586 = vset.pattern.permute.xlu0 0
        %587 = vperm.xlu0 %586, %v449
        %v588 = vpop.permute.xlu0 %587
        %591 = vset.pattern.permute.xlu0 0
        %592 = vperm.xlu0 %591, %v450
        %v593 = vpop.permute.xlu0 %592
        %595 = vmatprep.subr.mxu0 0.0
        %596 = vmatpush1.msra.mxu0 %v451
        %597 = vmatprep.subr.mxu0 0.0
        %598 = vmatpush1.msra.mxu0 %v452
        %599 = vmatprep.subr.mxu0 0.0
        %600 = vmatpush1.msra.mxu0 %v453
        %601 = vmatprep.subr.mxu0 0.0
        %602 = vmatpush1.msra.mxu0 %v454
        %603 = vmatprep.subr.mxu0 0.0
        %604 = vmatpush1.msra.mxu0 %v455
        %605 = vmatprep.subr.mxu0 0.0
        %606 = vmatpush1.msra.mxu0 %v456
        %607 = vmatprep.subr.mxu0 0.0
        %608 = vmatpush1.msra.mxu0 %v457
        %609 = vmatprep.subr.mxu0 0.0
        %610 = vmatpush1.msra.mxu0 %v458
        %611 = vmatprep.subr.mxu0 0.0
        %612 = vmatpush1.msra.mxu0 %v459
        %613 = vmatprep.subr.mxu0 0.0
        %614 = vmatpush1.msra.mxu0 %v460
        %615 = vmatprep.subr.mxu0 0.0
        %616 = vmatpush1.msra.mxu0 %v461
        %617 = vmatprep.subr.mxu0 0.0
        %618 = vmatpush1.msra.mxu0 %v462
        %619 = vmatprep.subr.mxu0 0.0
        %620 = vmatpush1.msra.mxu0 %v463
        %621 = vmatprep.subr.mxu0 0.0
        %622 = vmatpush1.msra.mxu0 %v464
        %623 = vmatprep.subr.mxu0 0.0
        %624 = vmatpush1.msra.mxu0 %v465
        %625 = vmatprep.subr.mxu0 0.0
        %626 = vmatpush1.msra.mxu0 %v466
        %627 = vmatprep.subr.mxu0 0.0
        %628 = vmatpush1.msra.mxu0 0.0
        %629 = vmatprep.subr.mxu0 0.0
        %630 = vmatpush1.msra.mxu0 0.0
        %631 = vmatprep.subr.mxu0 0.0
        %632 = vmatpush1.msra.mxu0 0.0
        %633 = vmatprep.subr.mxu0 0.0
        %634 = vmatpush1.msra.mxu0 0.0
        %635 = vmatprep.subr.mxu0 0.0
        %636 = vmatpush1.msra.mxu0 0.0
        %637 = vmatprep.subr.mxu0 0.0
        %638 = vmatpush1.msra.mxu0 0.0
        %639 = vmatprep.subr.mxu0 0.0
        %640 = vmatpush1.msra.mxu0 0.0
        %641 = vmatprep.subr.mxu0 0.0
        %642 = vmatpush1.msra.mxu0 0.0
        %643 = vmatprep.subr.mxu0 0.0
        %644 = vmatpush1.msra.mxu0 0.0
        %645 = vmatprep.subr.mxu0 0.0
        %646 = vmatpush1.msra.mxu0 0.0
        %647 = vmatprep.subr.mxu0 0.0
        %648 = vmatpush1.msra.mxu0 0.0
        %649 = vmatprep.subr.mxu0 0.0
        %650 = vmatpush1.msra.mxu0 0.0
        %651 = vmatprep.subr.mxu0 0.0
        %652 = vmatpush1.msra.mxu0 0.0
        %653 = vmatprep.subr.mxu0 0.0
        %654 = vmatpush1.msra.mxu0 0.0
        %655 = vmatprep.subr.mxu0 0.0
        %656 = vmatpush1.msra.mxu0 0.0
        %657 = vmatprep.subr.mxu0 0.0
        %658 = vmatpush1.msra.mxu0 0.0
        %659 = vmatprep.mubr.f32.mxu0 0.0
        %660 = vmatmul.mubr.f32.gmra.mrb[0].mxu0 %v419
        %v661 = vpop.f32.mrb[0].mxu0
        %v662 = vadd.f32 %v518, %v661
        %v663 = vpop.f32.mrb[0].mxu0
        %664 = vmatprep.mubr.f32.mxu0 0.0
        %665 = vmatmul.mubr.f32.gmra.mrb[0].mxu0 %v420
        %v666 = vpop.f32.mrb[0].mxu0
        %v667 = vadd.f32 %v523, %v666
        %v668 = vpop.f32.mrb[0].mxu0
        %669 = vmatprep.mubr.f32.mxu0 0.0
        %670 = vmatmul.mubr.f32.gmra.mrb[0].mxu0 %v421
        %v671 = vpop.f32.mrb[0].mxu0
        %v672 = vadd.f32 %v528, %v671
        %v673 = vpop.f32.mrb[0].mxu0
        %674 = vmatprep.mubr.f32.mxu0 0.0
        %675 = vmatmul.mubr.f32.gmra.mrb[0].mxu0 %v422
        %v676 = vpop.f32.mrb[0].mxu0
        %v677 = vadd.f32 %v533, %v676
        %v678 = vpop.f32.mrb[0].mxu0
        %679 = vmatprep.mubr.f32.mxu0 0.0
        %680 = vmatmul.mubr.f32.gmra.mrb[0].mxu0 %v423
        %v681 = vpop.f32.mrb[0].mxu0
        %v682 = vadd.f32 %v538, %v681
        %v683 = vpop.f32.mrb[0].mxu0
        %684 = vmatprep.mubr.f32.mxu0 0.0
        %685 = vmatmul.mubr.f32.gmra.mrb[0].mxu0 %v424
        %v686 = vpop.f32.mrb[0].mxu0
        %v687 = vadd.f32 %v543, %v686
        %v688 = vpop.f32.mrb[0].mxu0
        %689 = vmatprep.mubr.f32.mxu0 0.0
        %690 = vmatmul.mubr.f32.gmra.mrb[0].mxu0 %v425
        %v691 = vpop.f32.mrb[0].mxu0
        %v692 = vadd.f32 %v548, %v691
        %v693 = vpop.f32.mrb[0].mxu0
        %694 = vmatprep.mubr.f32.mxu0 0.0
        %695 = vmatmul.mubr.f32.gmra.mrb[0].mxu0 %v426
        %v696 = vpop.f32.mrb[0].mxu0
        %v697 = vadd.f32 %v553, %v696
        %v698 = vpop.f32.mrb[0].mxu0
        %699 = vmatprep.mubr.f32.mxu0 0.0
        %700 = vmatmul.mubr.f32.gmra.mrb[0].mxu0 %v427
        %v701 = vpop.f32.mrb[0].mxu0
        %v702 = vadd.f32 %v558, %v701
        %v703 = vpop.f32.mrb[0].mxu0
        %704 = vmatprep.mubr.f32.mxu0 0.0
        %705 = vmatmul.mubr.f32.gmra.mrb[0].mxu0 %v428
        %v706 = vpop.f32.mrb[0].mxu0
        %v707 = vadd.f32 %v563, %v706
        %v708 = vpop.f32.mrb[0].mxu0
        %709 = vmatprep.mubr.f32.mxu0 0.0
        %710 = vmatmul.mubr.f32.gmra.mrb[0].mxu0 %v429
        %v711 = vpop.f32.mrb[0].mxu0
        %v712 = vadd.f32 %v568, %v711
        %v713 = vpop.f32.mrb[0].mxu0
        %714 = vmatprep.mubr.f32.mxu0 0.0
        %715 = vmatmul.mubr.f32.gmra.mrb[0].mxu0 %v430
        %v716 = vpop.f32.mrb[0].mxu0
        %v717 = vadd.f32 %v573, %v716
        %v718 = vpop.f32.mrb[0].mxu0
        %719 = vmatprep.mubr.f32.mxu0 0.0
        %720 = vmatmul.mubr.f32.gmra.mrb[0].mxu0 %v431
        %v721 = vpop.f32.mrb[0].mxu0
        %v722 = vadd.f32 %v578, %v721
        %v723 = vpop.f32.mrb[0].mxu0
        %724 = vmatprep.mubr.f32.mxu0 0.0
        %725 = vmatmul.mubr.f32.gmra.mrb[0].mxu0 %v432
        %v726 = vpop.f32.mrb[0].mxu0
        %v727 = vadd.f32 %v583, %v726
        %v728 = vpop.f32.mrb[0].mxu0
        %729 = vmatprep.mubr.f32.mxu0 0.0
        %730 = vmatmul.mubr.f32.gmra.mrb[0].mxu0 %v433
        %v731 = vpop.f32.mrb[0].mxu0
        %v732 = vadd.f32 %v588, %v731
        %v733 = vpop.f32.mrb[0].mxu0
        %734 = vmatprep.mubr.f32.mxu0 0.0
        %735 = vmatmul.mubr.f32.gmra.mrb[0].mxu0 %v434
        %v736 = vpop.f32.mrb[0].mxu0
        %v737 = vadd.f32 %v593, %v736
        %v738 = vpop.f32.mrb[0].mxu0
        %739 = vdwg.mxu0
        %v740 = vadd.f32 %v467, %v662
        %v741 = vadd.f32 %v468, %v667
        %v742 = vadd.f32 %v469, %v672
        %v743 = vadd.f32 %v470, %v677
        %v744 = vadd.f32 %v471, %v682
        %v745 = vadd.f32 %v472, %v687
        %v746 = vadd.f32 %v473, %v692
        %v747 = vadd.f32 %v474, %v697
        %v748 = vadd.f32 %v475, %v702
        %v749 = vadd.f32 %v476, %v707
        %v750 = vadd.f32 %v477, %v712
        %v751 = vadd.f32 %v478, %v717
        %v752 = vadd.f32 %v479, %v722
        %v753 = vadd.f32 %v480, %v727
        %v754 = vadd.f32 %v481, %v732
        %v755 = vadd.f32 %v482, %v737
        %v756 = vmul.f32 %v740, 0.70710677
        %v757 = vmul.f32 %v741, 0.70710677
        %v758 = vmul.f32 %v742, 0.70710677
        %v759 = vmul.f32 %v743, 0.70710677
        %v760 = vmul.f32 %v744, 0.70710677
        %v761 = vmul.f32 %v745, 0.70710677
        %v762 = vmul.f32 %v746, 0.70710677
        %v763 = vmul.f32 %v747, 0.70710677
        %v764 = vmul.f32 %v748, 0.70710677
        %v765 = vmul.f32 %v749, 0.70710677
        %v766 = vmul.f32 %v750, 0.70710677
        %v767 = vmul.f32 %v751, 0.70710677
        %v768 = vmul.f32 %v752, 0.70710677
        %v769 = vmul.f32 %v753, 0.70710677
        %v770 = vmul.f32 %v754, 0.70710677
        %v771 = vmul.f32 %v755, 0.70710677
        %772 = vxpose.xlu0.b32.start [1/16] %v756, 128
        %773 = vxpose.xlu0.b32.cont [2/16] %v757, 128
        %774 = vxpose.xlu0.b32.cont [3/16] %v758, 128
        %775 = vxpose.xlu0.b32.cont [4/16] %v759, 128
        %776 = vxpose.xlu0.b32.cont [5/16] %v760, 128
        %777 = vxpose.xlu0.b32.cont [6/16] %v761, 128
        %778 = vxpose.xlu0.b32.cont [7/16] %v762, 128
        %779 = vxpose.xlu0.b32.cont [8/16] %v763, 128
        %780 = vxpose.xlu0.b32.cont [9/16] %v764, 128
        %781 = vxpose.xlu0.b32.cont [10/16] %v765, 128
        %782 = vxpose.xlu0.b32.cont [11/16] %v766, 128
        %783 = vxpose.xlu0.b32.cont [12/16] %v767, 128
        %784 = vxpose.xlu0.b32.cont [13/16] %v768, 128
        %785 = vxpose.xlu0.b32.cont [14/16] %v769, 128
        %786 = vxpose.xlu0.b32.cont [15/16] %v770, 128
        %787 = vxpose.xlu0.b32.end [16/16] %v771, 128
        %v788 = vpop.trf.xlu0
        %v789 = vpop.trf.xlu0
        %v790 = vpop.trf.xlu0
        %v791 = vpop.trf.xlu0
        %v792 = vpop.trf.xlu0
        %v793 = vpop.trf.xlu0
        %v794 = vpop.trf.xlu0
        %v795 = vpop.trf.xlu0
        %v796 = vpop.trf.xlu0
        %v797 = vpop.trf.xlu0
        %v798 = vpop.trf.xlu0
        %v799 = vpop.trf.xlu0
        %v800 = vpop.trf.xlu0
        %v801 = vpop.trf.xlu0
        %v802 = vpop.trf.xlu0
        %v803 = vpop.trf.xlu0
        %804 = vmatprep.subr.mxu0 0.0
        %805 = vmatpush1.msra.mxu0 %v483
        %806 = vmatprep.subr.mxu0 0.0
        %807 = vmatpush1.msra.mxu0 %v484
        %808 = vmatprep.subr.mxu0 0.0
        %809 = vmatpush1.msra.mxu0 %v485
        %810 = vmatprep.subr.mxu0 0.0
        %811 = vmatpush1.msra.mxu0 %v486
        %812 = vmatprep.subr.mxu0 0.0
        %813 = vmatpush1.msra.mxu0 %v487
        %814 = vmatprep.subr.mxu0 0.0
        %815 = vmatpush1.msra.mxu0 %v488
        %816 = vmatprep.subr.mxu0 0.0
        %817 = vmatpush1.msra.mxu0 %v489
        %818 = vmatprep.subr.mxu0 0.0
        %819 = vmatpush1.msra.mxu0 %v490
        %820 = vmatprep.subr.mxu0 0.0
        %821 = vmatpush1.msra.mxu0 %v491
        %822 = vmatprep.subr.mxu0 0.0
        %823 = vmatpush1.msra.mxu0 %v492
        %824 = vmatprep.subr.mxu0 0.0
        %825 = vmatpush1.msra.mxu0 %v493
        %826 = vmatprep.subr.mxu0 0.0
        %827 = vmatpush1.msra.mxu0 %v494
        %828 = vmatprep.subr.mxu0 0.0
        %829 = vmatpush1.msra.mxu0 %v495
        %830 = vmatprep.subr.mxu0 0.0
        %831 = vmatpush1.msra.mxu0 %v496
        %832 = vmatprep.subr.mxu0 0.0
        %833 = vmatpush1.msra.mxu0 %v497
        %834 = vmatprep.subr.mxu0 0.0
        %835 = vmatpush1.msra.mxu0 %v498
        %836 = vmatprep.subr.mxu0 0.0
        %837 = vmatpush1.msra.mxu0 0.0
        %838 = vmatprep.subr.mxu0 0.0
        %839 = vmatpush1.msra.mxu0 0.0
        %840 = vmatprep.subr.mxu0 0.0
        %841 = vmatpush1.msra.mxu0 0.0
        %842 = vmatprep.subr.mxu0 0.0
        %843 = vmatpush1.msra.mxu0 0.0
        %844 = vmatprep.subr.mxu0 0.0
        %845 = vmatpush1.msra.mxu0 0.0
        %846 = vmatprep.subr.mxu0 0.0
        %847 = vmatpush1.msra.mxu0 0.0
        %848 = vmatprep.subr.mxu0 0.0
        %849 = vmatpush1.msra.mxu0 0.0
        %850 = vmatprep.subr.mxu0 0.0
        %851 = vmatpush1.msra.mxu0 0.0
        %852 = vmatprep.subr.mxu0 0.0
        %853 = vmatpush1.msra.mxu0 0.0
        %854 = vmatprep.subr.mxu0 0.0
        %855 = vmatpush1.msra.mxu0 0.0
        %856 = vmatprep.subr.mxu0 0.0
        %857 = vmatpush1.msra.mxu0 0.0
        %858 = vmatprep.subr.mxu0 0.0
        %859 = vmatpush1.msra.mxu0 0.0
        %860 = vmatprep.subr.mxu0 0.0
        %861 = vmatpush1.msra.mxu0 0.0
        %862 = vmatprep.subr.mxu0 0.0
        %863 = vmatpush1.msra.mxu0 0.0
        %864 = vmatprep.subr.mxu0 0.0
        %865 = vmatpush1.msra.mxu0 0.0
        %866 = vmatprep.subr.mxu0 0.0
        %867 = vmatpush1.msra.mxu0 0.0
        %868 = vmatprep.mubr.f32.mxu0 0.0
        %869 = vmatmul.mubr.f32.gmra.mrb[0].mxu0 %v788
        %v870 = vpop.f32.mrb[0].mxu0
        %v871 = vadd.f32 0.0, %v870
        %v872 = vpop.f32.mrb[0].mxu0
        %873 = vmatprep.mubr.f32.mxu0 0.0
        %874 = vmatmul.mubr.f32.gmra.mrb[0].mxu0 %v789
        %v875 = vpop.f32.mrb[0].mxu0
        %v876 = vadd.f32 0.0, %v875
        %v877 = vpop.f32.mrb[0].mxu0
        %878 = vdwg.mxu0
        %879 = vmax.xlane.f32.xlu0 %v871
        %v880 = vpop.xlane.xlu0 %879
        %881 = vmax.xlane.f32.xlu0 %v876
        %v882 = vpop.xlane.xlu0 %881
        %v883 = vsub.f32 %v871, %v880
        %v884 = vsub.f32 %v876, %v882
        %v885 = vmul.f32 %v883, 1.442695
        %v886 = vpow.pop %v885
        %v887 = vmul.f32 %v884, 1.442695
        %v888 = vpow.pop %v887
        %889 = vadd.xlane.f32.xlu0 %v886
        %v890 = vpop.xlane.xlu0 %889
        %891 = vadd.xlane.f32.xlu0 %v888
        %v892 = vpop.xlane.xlu0 %891
        %v893 = vrcp.pop %v890
        %v894 = vmul.f32 %v886, %v893
        %v895 = vrcp.pop %v892
        %v896 = vmul.f32 %v888, %v895
        %897 = vmatprep.subr.mxu0 0.0
        %898 = vmatpush1.xpose.msra.mxu0 %v894
        %899 = vmatprep.subr.mxu0 0.0
        %900 = vmatpush1.xpose.msra.mxu0 %v896
        %901 = vmatprep.subr.mxu0 0.0
        %902 = vmatpush1.xpose.msra.mxu0 0.0
        %903 = vmatprep.subr.mxu0 0.0
        %904 = vmatpush1.xpose.msra.mxu0 0.0
        %905 = vmatprep.subr.mxu0 0.0
        %906 = vmatpush1.xpose.msra.mxu0 0.0
        %907 = vmatprep.subr.mxu0 0.0
        %908 = vmatpush1.xpose.msra.mxu0 0.0
        %909 = vmatprep.subr.mxu0 0.0
        %910 = vmatpush1.xpose.msra.mxu0 0.0
        %911 = vmatprep.subr.mxu0 0.0
        %912 = vmatpush1.xpose.msra.mxu0 0.0
        %913 = vmatprep.subr.mxu0 0.0
        %914 = vmatpush1.xpose.msra.mxu0 0.0
        %915 = vmatprep.subr.mxu0 0.0
        %916 = vmatpush1.xpose.msra.mxu0 0.0
        %917 = vmatprep.subr.mxu0 0.0
        %918 = vmatpush1.xpose.msra.mxu0 0.0
        %919 = vmatprep.subr.mxu0 0.0
        %920 = vmatpush1.xpose.msra.mxu0 0.0
        %921 = vmatprep.subr.mxu0 0.0
        %922 = vmatpush1.xpose.msra.mxu0 0.0
        %923 = vmatprep.subr.mxu0 0.0
        %924 = vmatpush1.xpose.msra.mxu0 0.0
        %925 = vmatprep.subr.mxu0 0.0
        %926 = vmatpush1.xpose.msra.mxu0 0.0
        %927 = vmatprep.subr.mxu0 0.0
        %928 = vmatpush1.xpose.msra.mxu0 0.0
        %929 = vmatprep.subr.mxu0 0.0
        %930 = vmatpush1.xpose.msra.mxu0 0.0
        %931 = vmatprep.subr.mxu0 0.0
        %932 = vmatpush1.xpose.msra.mxu0 0.0
        %933 = vmatprep.subr.mxu0 0.0
        %934 = vmatpush1.xpose.msra.mxu0 0.0
        %935 = vmatprep.subr.mxu0 0.0
        %936 = vmatpush1.xpose.msra.mxu0 0.0
        %937 = vmatprep.subr.mxu0 0.0
        %938 = vmatpush1.xpose.msra.mxu0 0.0
        %939 = vmatprep.subr.mxu0 0.0
        %940 = vmatpush1.xpose.msra.mxu0 0.0
        %941 = vmatprep.subr.mxu0 0.0
        %942 = vmatpush1.xpose.msra.mxu0 0.0
        %943 = vmatprep.subr.mxu0 0.0
        %944 = vmatpush1.xpose.msra.mxu0 0.0
        %945 = vmatprep.subr.mxu0 0.0
        %946 = vmatpush1.xpose.msra.mxu0 0.0
        %947 = vmatprep.subr.mxu0 0.0
        %948 = vmatpush1.xpose.msra.mxu0 0.0
        %949 = vmatprep.subr.mxu0 0.0
        %950 = vmatpush1.xpose.msra.mxu0 0.0
        %951 = vmatprep.subr.mxu0 0.0
        %952 = vmatpush1.xpose.msra.mxu0 0.0
        %953 = vmatprep.subr.mxu0 0.0
        %954 = vmatpush1.xpose.msra.mxu0 0.0
        %955 = vmatprep.subr.mxu0 0.0
        %956 = vmatpush1.xpose.msra.mxu0 0.0
        %957 = vmatprep.subr.mxu0 0.0
        %958 = vmatpush1.xpose.msra.mxu0 0.0
        %959 = vmatprep.subr.mxu0 0.0
        %960 = vmatpush1.xpose.msra.mxu0 0.0
        %961 = vmatprep.mubr.f32.mxu0 0.0
        %962 = vmatmul.mubr.f32.gmra.mrb[0].mxu0 %v499
        %v963 = vpop.f32.mrb[0].mxu0
        %v964 = vadd.f32 0.0, %v963
        %v965 = vpop.f32.mrb[0].mxu0
        %966 = vmatprep.mubr.f32.mxu0 0.0
        %967 = vmatmul.mubr.f32.gmra.mrb[0].mxu0 %v500
        %v968 = vpop.f32.mrb[0].mxu0
        %v969 = vadd.f32 0.0, %v968
        %v970 = vpop.f32.mrb[0].mxu0
        %971 = vmatprep.mubr.f32.mxu0 0.0
        %972 = vmatmul.mubr.f32.gmra.mrb[0].mxu0 %v501
        %v973 = vpop.f32.mrb[0].mxu0
        %v974 = vadd.f32 0.0, %v973
        %v975 = vpop.f32.mrb[0].mxu0
        %976 = vmatprep.mubr.f32.mxu0 0.0
        %977 = vmatmul.mubr.f32.gmra.mrb[0].mxu0 %v502
        %v978 = vpop.f32.mrb[0].mxu0
        %v979 = vadd.f32 0.0, %v978
        %v980 = vpop.f32.mrb[0].mxu0
        %981 = vmatprep.mubr.f32.mxu0 0.0
        %982 = vmatmul.mubr.f32.gmra.mrb[0].mxu0 %v503
        %v983 = vpop.f32.mrb[0].mxu0
        %v984 = vadd.f32 0.0, %v983
        %v985 = vpop.f32.mrb[0].mxu0
        %986 = vmatprep.mubr.f32.mxu0 0.0
        %987 = vmatmul.mubr.f32.gmra.mrb[0].mxu0 %v504
        %v988 = vpop.f32.mrb[0].mxu0
        %v989 = vadd.f32 0.0, %v988
        %v990 = vpop.f32.mrb[0].mxu0
        %991 = vmatprep.mubr.f32.mxu0 0.0
        %992 = vmatmul.mubr.f32.gmra.mrb[0].mxu0 %v505
        %v993 = vpop.f32.mrb[0].mxu0
        %v994 = vadd.f32 0.0, %v993
        %v995 = vpop.f32.mrb[0].mxu0
        %996 = vmatprep.mubr.f32.mxu0 0.0
        %997 = vmatmul.mubr.f32.gmra.mrb[0].mxu0 %v506
        %v998 = vpop.f32.mrb[0].mxu0
        %v999 = vadd.f32 0.0, %v998
        %v1000 = vpop.f32.mrb[0].mxu0
        %1001 = vmatprep.mubr.f32.mxu0 0.0
        %1002 = vmatmul.mubr.f32.gmra.mrb[0].mxu0 %v507
        %v1003 = vpop.f32.mrb[0].mxu0
        %v1004 = vadd.f32 0.0, %v1003
        %v1005 = vpop.f32.mrb[0].mxu0
        %1006 = vmatprep.mubr.f32.mxu0 0.0
        %1007 = vmatmul.mubr.f32.gmra.mrb[0].mxu0 %v508
        %v1008 = vpop.f32.mrb[0].mxu0
        %v1009 = vadd.f32 0.0, %v1008
        %v1010 = vpop.f32.mrb[0].mxu0
        %1011 = vmatprep.mubr.f32.mxu0 0.0
        %1012 = vmatmul.mubr.f32.gmra.mrb[0].mxu0 %v509
        %v1013 = vpop.f32.mrb[0].mxu0
        %v1014 = vadd.f32 0.0, %v1013
        %v1015 = vpop.f32.mrb[0].mxu0
        %1016 = vmatprep.mubr.f32.mxu0 0.0
        %1017 = vmatmul.mubr.f32.gmra.mrb[0].mxu0 %v510
        %v1018 = vpop.f32.mrb[0].mxu0
        %v1019 = vadd.f32 0.0, %v1018
        %v1020 = vpop.f32.mrb[0].mxu0
        %1021 = vmatprep.mubr.f32.mxu0 0.0
        %1022 = vmatmul.mubr.f32.gmra.mrb[0].mxu0 %v511
        %v1023 = vpop.f32.mrb[0].mxu0
        %v1024 = vadd.f32 0.0, %v1023
        %v1025 = vpop.f32.mrb[0].mxu0
        %1026 = vmatprep.mubr.f32.mxu0 0.0
        %1027 = vmatmul.mubr.f32.gmra.mrb[0].mxu0 %v512
        %v1028 = vpop.f32.mrb[0].mxu0
        %v1029 = vadd.f32 0.0, %v1028
        %v1030 = vpop.f32.mrb[0].mxu0
        %1031 = vmatprep.mubr.f32.mxu0 0.0
        %1032 = vmatmul.mubr.f32.gmra.mrb[0].mxu0 %v513
        %v1033 = vpop.f32.mrb[0].mxu0
        %v1034 = vadd.f32 0.0, %v1033
        %v1035 = vpop.f32.mrb[0].mxu0
        %1036 = vmatprep.mubr.f32.mxu0 0.0
        %1037 = vmatmul.mubr.f32.gmra.mrb[0].mxu0 %v514
        %v1038 = vpop.f32.mrb[0].mxu0
        %v1039 = vadd.f32 0.0, %v1038
        %v1040 = vpop.f32.mrb[0].mxu0
        %1041 = vdwg.mxu0
        %1042 = vst [vmem:[%s372] sm:$0xff] %v894
        %1043 = vst [vmem:[%s372 + $0x8] sm:$0xff] %v896
        %vm1044 = vcmask 130048
        %1045 = vst.msk [vmem:[%s415] sm:$0xff] %vm1044, %v964
        %1046 = vst.msk [vmem:[%s415 + $0x8] sm:$0xff] %vm1044, %v969
        %1047 = vst.msk [vmem:[%s415 + $0x10] sm:$0xff] %vm1044, %v974
        %1048 = vst.msk [vmem:[%s415 + $0x18] sm:$0xff] %vm1044, %v979
        %1049 = vst.msk [vmem:[%s415 + $0x20] sm:$0xff] %vm1044, %v984
        %1050 = vst.msk [vmem:[%s415 + $0x28] sm:$0xff] %vm1044, %v989
        %1051 = vst.msk [vmem:[%s415 + $0x30] sm:$0xff] %vm1044, %v994
        %1052 = vst.msk [vmem:[%s415 + $0x38] sm:$0xff] %vm1044, %v999
        %1053 = vst.msk [vmem:[%s415 + $0x40] sm:$0xff] %vm1044, %v1004
        %1054 = vst.msk [vmem:[%s415 + $0x48] sm:$0xff] %vm1044, %v1009
        %1055 = vst.msk [vmem:[%s415 + $0x50] sm:$0xff] %vm1044, %v1014
        %1056 = vst.msk [vmem:[%s415 + $0x58] sm:$0xff] %vm1044, %v1019
        %1057 = vst.msk [vmem:[%s415 + $0x60] sm:$0xff] %vm1044, %v1024
        %1058 = vst.msk [vmem:[%s415 + $0x68] sm:$0xff] %vm1044, %v1029
        %1059 = vst.msk [vmem:[%s415 + $0x70] sm:$0xff] %vm1044, %v1034
        %1060 = vst.msk [vmem:[%s415 + $0x78] sm:$0xff] %vm1044, %v1039
        %s1061 = scalar_lea.vmem %s391, 128
        %v1062 = vld [vmem:[%s1061] sm:$0xff]
        %v1063 = vld [vmem:[%s1061 + $0x8] sm:$0xff]
        %v1064 = vld [vmem:[%s1061 + $0x10] sm:$0xff]
        %v1065 = vld [vmem:[%s1061 + $0x18] sm:$0xff]
        %v1066 = vld [vmem:[%s1061 + $0x20] sm:$0xff]
        %v1067 = vld [vmem:[%s1061 + $0x28] sm:$0xff]
        %v1068 = vld [vmem:[%s1061 + $0x30] sm:$0xff]
        %v1069 = vld [vmem:[%s1061 + $0x38] sm:$0xff]
        %v1070 = vld [vmem:[%s1061 + $0x40] sm:$0xff]
        %v1071 = vld [vmem:[%s1061 + $0x48] sm:$0xff]
        %v1072 = vld [vmem:[%s1061 + $0x50] sm:$0xff]
        %v1073 = vld [vmem:[%s1061 + $0x58] sm:$0xff]
        %v1074 = vld [vmem:[%s1061 + $0x60] sm:$0xff]
        %v1075 = vld [vmem:[%s1061 + $0x68] sm:$0xff]
        %v1076 = vld [vmem:[%s1061 + $0x70] sm:$0xff]
        %v1077 = vld [vmem:[%s1061 + $0x78] sm:$0xff]
        %s1078 = scalar_lea.vmem %s381, 128
        %v1079 = vld [vmem:[%s1078] sm:$0xff]
        %v1080 = vld [vmem:[%s1078 + $0x8] sm:$0xff]
        %v1081 = vld [vmem:[%s1078 + $0x10] sm:$0xff]
        %v1082 = vld [vmem:[%s1078 + $0x18] sm:$0xff]
        %v1083 = vld [vmem:[%s1078 + $0x20] sm:$0xff]
        %v1084 = vld [vmem:[%s1078 + $0x28] sm:$0xff]
        %v1085 = vld [vmem:[%s1078 + $0x30] sm:$0xff]
        %v1086 = vld [vmem:[%s1078 + $0x38] sm:$0xff]
        %v1087 = vld [vmem:[%s1078 + $0x40] sm:$0xff]
        %v1088 = vld [vmem:[%s1078 + $0x48] sm:$0xff]
        %v1089 = vld [vmem:[%s1078 + $0x50] sm:$0xff]
        %v1090 = vld [vmem:[%s1078 + $0x58] sm:$0xff]
        %v1091 = vld [vmem:[%s1078 + $0x60] sm:$0xff]
        %v1092 = vld [vmem:[%s1078 + $0x68] sm:$0xff]
        %v1093 = vld [vmem:[%s1078 + $0x70] sm:$0xff]
        %v1094 = vld [vmem:[%s1078 + $0x78] sm:$0xff]
        %s1095 = scalar_lea.vmem %s398, 128
        %v1096 = vld [vmem:[%s1095] sm:$0xff]
        %v1097 = vld [vmem:[%s1095 + $0x8] sm:$0xff]
        %v1098 = vld [vmem:[%s1095 + $0x10] sm:$0xff]
        %v1099 = vld [vmem:[%s1095 + $0x18] sm:$0xff]
        %v1100 = vld [vmem:[%s1095 + $0x20] sm:$0xff]
        %v1101 = vld [vmem:[%s1095 + $0x28] sm:$0xff]
        %v1102 = vld [vmem:[%s1095 + $0x30] sm:$0xff]
        %v1103 = vld [vmem:[%s1095 + $0x38] sm:$0xff]
        %v1104 = vld [vmem:[%s1095 + $0x40] sm:$0xff]
        %v1105 = vld [vmem:[%s1095 + $0x48] sm:$0xff]
        %v1106 = vld [vmem:[%s1095 + $0x50] sm:$0xff]
        %v1107 = vld [vmem:[%s1095 + $0x58] sm:$0xff]
        %v1108 = vld [vmem:[%s1095 + $0x60] sm:$0xff]
        %v1109 = vld [vmem:[%s1095 + $0x68] sm:$0xff]
        %v1110 = vld [vmem:[%s1095 + $0x70] sm:$0xff]
        %v1111 = vld [vmem:[%s1095 + $0x78] sm:$0xff]
        %s1112 = scalar_lea.vmem %s405, 128
        %v1113 = vld [vmem:[%s1112] sm:$0xff]
        %v1114 = vld [vmem:[%s1112 + $0x8] sm:$0xff]
        %v1115 = vld [vmem:[%s1112 + $0x10] sm:$0xff]
        %v1116 = vld [vmem:[%s1112 + $0x18] sm:$0xff]
        %v1117 = vld [vmem:[%s1112 + $0x20] sm:$0xff]
        %v1118 = vld [vmem:[%s1112 + $0x28] sm:$0xff]
        %v1119 = vld [vmem:[%s1112 + $0x30] sm:$0xff]
        %v1120 = vld [vmem:[%s1112 + $0x38] sm:$0xff]
        %v1121 = vld [vmem:[%s1112 + $0x40] sm:$0xff]
        %v1122 = vld [vmem:[%s1112 + $0x48] sm:$0xff]
        %v1123 = vld [vmem:[%s1112 + $0x50] sm:$0xff]
        %v1124 = vld [vmem:[%s1112 + $0x58] sm:$0xff]
        %v1125 = vld [vmem:[%s1112 + $0x60] sm:$0xff]
        %v1126 = vld [vmem:[%s1112 + $0x68] sm:$0xff]
        %v1127 = vld [vmem:[%s1112 + $0x70] sm:$0xff]
        %v1128 = vld [vmem:[%s1112 + $0x78] sm:$0xff]
        %1129 = vmatprep.subr.mxu0 0.0
        %1130 = vmatpush1.msra.mxu0 %v1062
        %1131 = vmatprep.subr.mxu0 0.0
        %1132 = vmatpush1.msra.mxu0 %v1063
        %1133 = vmatprep.subr.mxu0 0.0
        %1134 = vmatpush1.msra.mxu0 %v1064
        %1135 = vmatprep.subr.mxu0 0.0
        %1136 = vmatpush1.msra.mxu0 %v1065
        %1137 = vmatprep.subr.mxu0 0.0
        %1138 = vmatpush1.msra.mxu0 %v1066
        %1139 = vmatprep.subr.mxu0 0.0
        %1140 = vmatpush1.msra.mxu0 %v1067
        %1141 = vmatprep.subr.mxu0 0.0
        %1142 = vmatpush1.msra.mxu0 %v1068
        %1143 = vmatprep.subr.mxu0 0.0
        %1144 = vmatpush1.msra.mxu0 %v1069
        %1145 = vmatprep.subr.mxu0 0.0
        %1146 = vmatpush1.msra.mxu0 %v1070
        %1147 = vmatprep.subr.mxu0 0.0
        %1148 = vmatpush1.msra.mxu0 %v1071
        %1149 = vmatprep.subr.mxu0 0.0
        %1150 = vmatpush1.msra.mxu0 %v1072
        %1151 = vmatprep.subr.mxu0 0.0
        %1152 = vmatpush1.msra.mxu0 %v1073
        %1153 = vmatprep.subr.mxu0 0.0
        %1154 = vmatpush1.msra.mxu0 %v1074
        %1155 = vmatprep.subr.mxu0 0.0
        %1156 = vmatpush1.msra.mxu0 %v1075
        %1157 = vmatprep.subr.mxu0 0.0
        %1158 = vmatpush1.msra.mxu0 %v1076
        %1159 = vmatprep.subr.mxu0 0.0
        %1160 = vmatpush1.msra.mxu0 %v1077
        %1161 = vmatprep.subr.mxu0 0.0
        %1162 = vmatpush1.msra.mxu0 0.0
        %1163 = vmatprep.subr.mxu0 0.0
        %1164 = vmatpush1.msra.mxu0 0.0
        %1165 = vmatprep.subr.mxu0 0.0
        %1166 = vmatpush1.msra.mxu0 0.0
        %1167 = vmatprep.subr.mxu0 0.0
        %1168 = vmatpush1.msra.mxu0 0.0
        %1169 = vmatprep.subr.mxu0 0.0
        %1170 = vmatpush1.msra.mxu0 0.0
        %1171 = vmatprep.subr.mxu0 0.0
        %1172 = vmatpush1.msra.mxu0 0.0
        %1173 = vmatprep.subr.mxu0 0.0
        %1174 = vmatpush1.msra.mxu0 0.0
        %1175 = vmatprep.subr.mxu0 0.0
        %1176 = vmatpush1.msra.mxu0 0.0
        %1177 = vmatprep.subr.mxu0 0.0
        %1178 = vmatpush1.msra.mxu0 0.0
        %1179 = vmatprep.subr.mxu0 0.0
        %1180 = vmatpush1.msra.mxu0 0.0
        %1181 = vmatprep.subr.mxu0 0.0
        %1182 = vmatpush1.msra.mxu0 0.0
        %1183 = vmatprep.subr.mxu0 0.0
        %1184 = vmatpush1.msra.mxu0 0.0
        %1185 = vmatprep.subr.mxu0 0.0
        %1186 = vmatpush1.msra.mxu0 0.0
        %1187 = vmatprep.subr.mxu0 0.0
        %1188 = vmatpush1.msra.mxu0 0.0
        %1189 = vmatprep.subr.mxu0 0.0
        %1190 = vmatpush1.msra.mxu0 0.0
        %1191 = vmatprep.subr.mxu0 0.0
        %1192 = vmatpush1.msra.mxu0 0.0
        %1193 = vmatprep.mubr.f32.mxu0 0.0
        %1194 = vmatmul.mubr.f32.gmra.mrb[0].mxu0 %v419
        %v1195 = vpop.f32.mrb[0].mxu0
        %v1196 = vadd.f32 %v518, %v1195
        %v1197 = vpop.f32.mrb[0].mxu0
        %1198 = vmatprep.mubr.f32.mxu0 0.0
        %1199 = vmatmul.mubr.f32.gmra.mrb[0].mxu0 %v420
        %v1200 = vpop.f32.mrb[0].mxu0
        %v1201 = vadd.f32 %v523, %v1200
        %v1202 = vpop.f32.mrb[0].mxu0
        %1203 = vmatprep.mubr.f32.mxu0 0.0
        %1204 = vmatmul.mubr.f32.gmra.mrb[0].mxu0 %v421
        %v1205 = vpop.f32.mrb[0].mxu0
        %v1206 = vadd.f32 %v528, %v1205
        %v1207 = vpop.f32.mrb[0].mxu0
        %1208 = vmatprep.mubr.f32.mxu0 0.0
        %1209 = vmatmul.mubr.f32.gmra.mrb[0].mxu0 %v422
        %v1210 = vpop.f32.mrb[0].mxu0
        %v1211 = vadd.f32 %v533, %v1210
        %v1212 = vpop.f32.mrb[0].mxu0
        %1213 = vmatprep.mubr.f32.mxu0 0.0
        %1214 = vmatmul.mubr.f32.gmra.mrb[0].mxu0 %v423
        %v1215 = vpop.f32.mrb[0].mxu0
        %v1216 = vadd.f32 %v538, %v1215
        %v1217 = vpop.f32.mrb[0].mxu0
        %1218 = vmatprep.mubr.f32.mxu0 0.0
        %1219 = vmatmul.mubr.f32.gmra.mrb[0].mxu0 %v424
        %v1220 = vpop.f32.mrb[0].mxu0
        %v1221 = vadd.f32 %v543, %v1220
        %v1222 = vpop.f32.mrb[0].mxu0
        %1223 = vmatprep.mubr.f32.mxu0 0.0
        %1224 = vmatmul.mubr.f32.gmra.mrb[0].mxu0 %v425
        %v1225 = vpop.f32.mrb[0].mxu0
        %v1226 = vadd.f32 %v548, %v1225
        %v1227 = vpop.f32.mrb[0].mxu0
        %1228 = vmatprep.mubr.f32.mxu0 0.0
        %1229 = vmatmul.mubr.f32.gmra.mrb[0].mxu0 %v426
        %v1230 = vpop.f32.mrb[0].mxu0
        %v1231 = vadd.f32 %v553, %v1230
        %v1232 = vpop.f32.mrb[0].mxu0
        %1233 = vmatprep.mubr.f32.mxu0 0.0
        %1234 = vmatmul.mubr.f32.gmra.mrb[0].mxu0 %v427
        %v1235 = vpop.f32.mrb[0].mxu0
        %v1236 = vadd.f32 %v558, %v1235
        %v1237 = vpop.f32.mrb[0].mxu0
        %1238 = vmatprep.mubr.f32.mxu0 0.0
        %1239 = vmatmul.mubr.f32.gmra.mrb[0].mxu0 %v428
        %v1240 = vpop.f32.mrb[0].mxu0
        %v1241 = vadd.f32 %v563, %v1240
        %v1242 = vpop.f32.mrb[0].mxu0
        %1243 = vmatprep.mubr.f32.mxu0 0.0
        %1244 = vmatmul.mubr.f32.gmra.mrb[0].mxu0 %v429
        %v1245 = vpop.f32.mrb[0].mxu0
        %v1246 = vadd.f32 %v568, %v1245
        %v1247 = vpop.f32.mrb[0].mxu0
        %1248 = vmatprep.mubr.f32.mxu0 0.0
        %1249 = vmatmul.mubr.f32.gmra.mrb[0].mxu0 %v430
        %v1250 = vpop.f32.mrb[0].mxu0
        %v1251 = vadd.f32 %v573, %v1250
        %v1252 = vpop.f32.mrb[0].mxu0
        %1253 = vmatprep.mubr.f32.mxu0 0.0
        %1254 = vmatmul.mubr.f32.gmra.mrb[0].mxu0 %v431
        %v1255 = vpop.f32.mrb[0].mxu0
        %v1256 = vadd.f32 %v578, %v1255
        %v1257 = vpop.f32.mrb[0].mxu0
        %1258 = vmatprep.mubr.f32.mxu0 0.0
        %1259 = vmatmul.mubr.f32.gmra.mrb[0].mxu0 %v432
        %v1260 = vpop.f32.mrb[0].mxu0
        %v1261 = vadd.f32 %v583, %v1260
        %v1262 = vpop.f32.mrb[0].mxu0
        %1263 = vmatprep.mubr.f32.mxu0 0.0
        %1264 = vmatmul.mubr.f32.gmra.mrb[0].mxu0 %v433
        %v1265 = vpop.f32.mrb[0].mxu0
        %v1266 = vadd.f32 %v588, %v1265
        %v1267 = vpop.f32.mrb[0].mxu0
        %1268 = vmatprep.mubr.f32.mxu0 0.0
        %1269 = vmatmul.mubr.f32.gmra.mrb[0].mxu0 %v434
        %v1270 = vpop.f32.mrb[0].mxu0
        %v1271 = vadd.f32 %v593, %v1270
        %v1272 = vpop.f32.mrb[0].mxu0
        %1273 = vdwg.mxu0
        %v1274 = vadd.f32 %v1079, %v1196
        %v1275 = vadd.f32 %v1080, %v1201
        %v1276 = vadd.f32 %v1081, %v1206
        %v1277 = vadd.f32 %v1082, %v1211
        %v1278 = vadd.f32 %v1083, %v1216
        %v1279 = vadd.f32 %v1084, %v1221
        %v1280 = vadd.f32 %v1085, %v1226
        %v1281 = vadd.f32 %v1086, %v1231
        %v1282 = vadd.f32 %v1087, %v1236
        %v1283 = vadd.f32 %v1088, %v1241
        %v1284 = vadd.f32 %v1089, %v1246
        %v1285 = vadd.f32 %v1090, %v1251
        %v1286 = vadd.f32 %v1091, %v1256
        %v1287 = vadd.f32 %v1092, %v1261
        %v1288 = vadd.f32 %v1093, %v1266
        %v1289 = vadd.f32 %v1094, %v1271
        %v1290 = vmul.f32 %v1274, 0.70710677
        %v1291 = vmul.f32 %v1275, 0.70710677
        %v1292 = vmul.f32 %v1276, 0.70710677
        %v1293 = vmul.f32 %v1277, 0.70710677
        %v1294 = vmul.f32 %v1278, 0.70710677
        %v1295 = vmul.f32 %v1279, 0.70710677
        %v1296 = vmul.f32 %v1280, 0.70710677
        %v1297 = vmul.f32 %v1281, 0.70710677
        %v1298 = vmul.f32 %v1282, 0.70710677
        %v1299 = vmul.f32 %v1283, 0.70710677
        %v1300 = vmul.f32 %v1284, 0.70710677
        %v1301 = vmul.f32 %v1285, 0.70710677
        %v1302 = vmul.f32 %v1286, 0.70710677
        %v1303 = vmul.f32 %v1287, 0.70710677
        %v1304 = vmul.f32 %v1288, 0.70710677
        %v1305 = vmul.f32 %v1289, 0.70710677
        %1306 = vxpose.xlu0.b32.start [1/16] %v1290, 128
        %1307 = vxpose.xlu0.b32.cont [2/16] %v1291, 128
        %1308 = vxpose.xlu0.b32.cont [3/16] %v1292, 128
        %1309 = vxpose.xlu0.b32.cont [4/16] %v1293, 128
        %1310 = vxpose.xlu0.b32.cont [5/16] %v1294, 128
        %1311 = vxpose.xlu0.b32.cont [6/16] %v1295, 128
        %1312 = vxpose.xlu0.b32.cont [7/16] %v1296, 128
        %1313 = vxpose.xlu0.b32.cont [8/16] %v1297, 128
        %1314 = vxpose.xlu0.b32.cont [9/16] %v1298, 128
        %1315 = vxpose.xlu0.b32.cont [10/16] %v1299, 128
        %1316 = vxpose.xlu0.b32.cont [11/16] %v1300, 128
        %1317 = vxpose.xlu0.b32.cont [12/16] %v1301, 128
        %1318 = vxpose.xlu0.b32.cont [13/16] %v1302, 128
        %1319 = vxpose.xlu0.b32.cont [14/16] %v1303, 128
        %1320 = vxpose.xlu0.b32.cont [15/16] %v1304, 128
        %1321 = vxpose.xlu0.b32.end [16/16] %v1305, 128
        %v1322 = vpop.trf.xlu0
        %v1323 = vpop.trf.xlu0
        %v1324 = vpop.trf.xlu0
        %v1325 = vpop.trf.xlu0
        %v1326 = vpop.trf.xlu0
        %v1327 = vpop.trf.xlu0
        %v1328 = vpop.trf.xlu0
        %v1329 = vpop.trf.xlu0
        %v1330 = vpop.trf.xlu0
        %v1331 = vpop.trf.xlu0
        %v1332 = vpop.trf.xlu0
        %v1333 = vpop.trf.xlu0
        %v1334 = vpop.trf.xlu0
        %v1335 = vpop.trf.xlu0
        %v1336 = vpop.trf.xlu0
        %v1337 = vpop.trf.xlu0
        %1338 = vmatprep.subr.mxu0 0.0
        %1339 = vmatpush1.msra.mxu0 %v1096
        %1340 = vmatprep.subr.mxu0 0.0
        %1341 = vmatpush1.msra.mxu0 %v1097
        %1342 = vmatprep.subr.mxu0 0.0
        %1343 = vmatpush1.msra.mxu0 %v1098
        %1344 = vmatprep.subr.mxu0 0.0
        %1345 = vmatpush1.msra.mxu0 %v1099
        %1346 = vmatprep.subr.mxu0 0.0
        %1347 = vmatpush1.msra.mxu0 %v1100
        %1348 = vmatprep.subr.mxu0 0.0
        %1349 = vmatpush1.msra.mxu0 %v1101
        %1350 = vmatprep.subr.mxu0 0.0
        %1351 = vmatpush1.msra.mxu0 %v1102
        %1352 = vmatprep.subr.mxu0 0.0
        %1353 = vmatpush1.msra.mxu0 %v1103
        %1354 = vmatprep.subr.mxu0 0.0
        %1355 = vmatpush1.msra.mxu0 %v1104
        %1356 = vmatprep.subr.mxu0 0.0
        %1357 = vmatpush1.msra.mxu0 %v1105
        %1358 = vmatprep.subr.mxu0 0.0
        %1359 = vmatpush1.msra.mxu0 %v1106
        %1360 = vmatprep.subr.mxu0 0.0
        %1361 = vmatpush1.msra.mxu0 %v1107
        %1362 = vmatprep.subr.mxu0 0.0
        %1363 = vmatpush1.msra.mxu0 %v1108
        %1364 = vmatprep.subr.mxu0 0.0
        %1365 = vmatpush1.msra.mxu0 %v1109
        %1366 = vmatprep.subr.mxu0 0.0
        %1367 = vmatpush1.msra.mxu0 %v1110
        %1368 = vmatprep.subr.mxu0 0.0
        %1369 = vmatpush1.msra.mxu0 %v1111
        %1370 = vmatprep.subr.mxu0 0.0
        %1371 = vmatpush1.msra.mxu0 0.0
        %1372 = vmatprep.subr.mxu0 0.0
        %1373 = vmatpush1.msra.mxu0 0.0
        %1374 = vmatprep.subr.mxu0 0.0
        %1375 = vmatpush1.msra.mxu0 0.0
        %1376 = vmatprep.subr.mxu0 0.0
        %1377 = vmatpush1.msra.mxu0 0.0
        %1378 = vmatprep.subr.mxu0 0.0
        %1379 = vmatpush1.msra.mxu0 0.0
        %1380 = vmatprep.subr.mxu0 0.0
        %1381 = vmatpush1.msra.mxu0 0.0
        %1382 = vmatprep.subr.mxu0 0.0
        %1383 = vmatpush1.msra.mxu0 0.0
        %1384 = vmatprep.subr.mxu0 0.0
        %1385 = vmatpush1.msra.mxu0 0.0
        %1386 = vmatprep.subr.mxu0 0.0
        %1387 = vmatpush1.msra.mxu0 0.0
        %1388 = vmatprep.subr.mxu0 0.0
        %1389 = vmatpush1.msra.mxu0 0.0
        %1390 = vmatprep.subr.mxu0 0.0
        %1391 = vmatpush1.msra.mxu0 0.0
        %1392 = vmatprep.subr.mxu0 0.0
        %1393 = vmatpush1.msra.mxu0 0.0
        %1394 = vmatprep.subr.mxu0 0.0
        %1395 = vmatpush1.msra.mxu0 0.0
        %1396 = vmatprep.subr.mxu0 0.0
        %1397 = vmatpush1.msra.mxu0 0.0
        %1398 = vmatprep.subr.mxu0 0.0
        %1399 = vmatpush1.msra.mxu0 0.0
        %1400 = vmatprep.subr.mxu0 0.0
        %1401 = vmatpush1.msra.mxu0 0.0
        %1402 = vmatprep.mubr.f32.mxu0 0.0
        %1403 = vmatmul.mubr.f32.gmra.mrb[0].mxu0 %v1322
        %v1404 = vpop.f32.mrb[0].mxu0
        %v1405 = vadd.f32 0.0, %v1404
        %v1406 = vpop.f32.mrb[0].mxu0
        %1407 = vmatprep.mubr.f32.mxu0 0.0
        %1408 = vmatmul.mubr.f32.gmra.mrb[0].mxu0 %v1323
        %v1409 = vpop.f32.mrb[0].mxu0
        %v1410 = vadd.f32 0.0, %v1409
        %v1411 = vpop.f32.mrb[0].mxu0
        %1412 = vdwg.mxu0
        %1413 = vmax.xlane.f32.xlu0 %v1405
        %v1414 = vpop.xlane.xlu0 %1413
        %1415 = vmax.xlane.f32.xlu0 %v1410
        %v1416 = vpop.xlane.xlu0 %1415
        %v1417 = vsub.f32 %v1405, %v1414
        %v1418 = vsub.f32 %v1410, %v1416
        %v1419 = vmul.f32 %v1417, 1.442695
        %v1420 = vpow.pop %v1419
        %v1421 = vmul.f32 %v1418, 1.442695
        %v1422 = vpow.pop %v1421
        %1423 = vadd.xlane.f32.xlu0 %v1420
        %v1424 = vpop.xlane.xlu0 %1423
        %1425 = vadd.xlane.f32.xlu0 %v1422
        %v1426 = vpop.xlane.xlu0 %1425
        %v1427 = vrcp.pop %v1424
        %v1428 = vmul.f32 %v1420, %v1427
        %v1429 = vrcp.pop %v1426
        %v1430 = vmul.f32 %v1422, %v1429
        %1431 = vmatprep.subr.mxu0 0.0
        %1432 = vmatpush1.xpose.msra.mxu0 %v1428
        %1433 = vmatprep.subr.mxu0 0.0
        %1434 = vmatpush1.xpose.msra.mxu0 %v1430
        %1435 = vmatprep.subr.mxu0 0.0
        %1436 = vmatpush1.xpose.msra.mxu0 0.0
        %1437 = vmatprep.subr.mxu0 0.0
        %1438 = vmatpush1.xpose.msra.mxu0 0.0
        %1439 = vmatprep.subr.mxu0 0.0
        %1440 = vmatpush1.xpose.msra.mxu0 0.0
        %1441 = vmatprep.subr.mxu0 0.0
        %1442 = vmatpush1.xpose.msra.mxu0 0.0
        %1443 = vmatprep.subr.mxu0 0.0
        %1444 = vmatpush1.xpose.msra.mxu0 0.0
        %1445 = vmatprep.subr.mxu0 0.0
        %1446 = vmatpush1.xpose.msra.mxu0 0.0
        %1447 = vmatprep.subr.mxu0 0.0
        %1448 = vmatpush1.xpose.msra.mxu0 0.0
        %1449 = vmatprep.subr.mxu0 0.0
        %1450 = vmatpush1.xpose.msra.mxu0 0.0
        %1451 = vmatprep.subr.mxu0 0.0
        %1452 = vmatpush1.xpose.msra.mxu0 0.0
        %1453 = vmatprep.subr.mxu0 0.0
        %1454 = vmatpush1.xpose.msra.mxu0 0.0
        %1455 = vmatprep.subr.mxu0 0.0
        %1456 = vmatpush1.xpose.msra.mxu0 0.0
        %1457 = vmatprep.subr.mxu0 0.0
        %1458 = vmatpush1.xpose.msra.mxu0 0.0
        %1459 = vmatprep.subr.mxu0 0.0
        %1460 = vmatpush1.xpose.msra.mxu0 0.0
        %1461 = vmatprep.subr.mxu0 0.0
        %1462 = vmatpush1.xpose.msra.mxu0 0.0
        %1463 = vmatprep.subr.mxu0 0.0
        %1464 = vmatpush1.xpose.msra.mxu0 0.0
        %1465 = vmatprep.subr.mxu0 0.0
        %1466 = vmatpush1.xpose.msra.mxu0 0.0
        %1467 = vmatprep.subr.mxu0 0.0
        %1468 = vmatpush1.xpose.msra.mxu0 0.0
        %1469 = vmatprep.subr.mxu0 0.0
        %1470 = vmatpush1.xpose.msra.mxu0 0.0
        %1471 = vmatprep.subr.mxu0 0.0
        %1472 = vmatpush1.xpose.msra.mxu0 0.0
        %1473 = vmatprep.subr.mxu0 0.0
        %1474 = vmatpush1.xpose.msra.mxu0 0.0
        %1475 = vmatprep.subr.mxu0 0.0
        %1476 = vmatpush1.xpose.msra.mxu0 0.0
        %1477 = vmatprep.subr.mxu0 0.0
        %1478 = vmatpush1.xpose.msra.mxu0 0.0
        %1479 = vmatprep.subr.mxu0 0.0
        %1480 = vmatpush1.xpose.msra.mxu0 0.0
        %1481 = vmatprep.subr.mxu0 0.0
        %1482 = vmatpush1.xpose.msra.mxu0 0.0
        %1483 = vmatprep.subr.mxu0 0.0
        %1484 = vmatpush1.xpose.msra.mxu0 0.0
        %1485 = vmatprep.subr.mxu0 0.0
        %1486 = vmatpush1.xpose.msra.mxu0 0.0
        %1487 = vmatprep.subr.mxu0 0.0
        %1488 = vmatpush1.xpose.msra.mxu0 0.0
        %1489 = vmatprep.subr.mxu0 0.0
        %1490 = vmatpush1.xpose.msra.mxu0 0.0
        %1491 = vmatprep.subr.mxu0 0.0
        %1492 = vmatpush1.xpose.msra.mxu0 0.0
        %1493 = vmatprep.subr.mxu0 0.0
        %1494 = vmatpush1.xpose.msra.mxu0 0.0
        %1495 = vmatprep.mubr.f32.mxu0 0.0
        %1496 = vmatmul.mubr.f32.gmra.mrb[0].mxu0 %v1113
        %v1497 = vpop.f32.mrb[0].mxu0
        %v1498 = vadd.f32 0.0, %v1497
        %v1499 = vpop.f32.mrb[0].mxu0
        %1500 = vmatprep.mubr.f32.mxu0 0.0
        %1501 = vmatmul.mubr.f32.gmra.mrb[0].mxu0 %v1114
        %v1502 = vpop.f32.mrb[0].mxu0
        %v1503 = vadd.f32 0.0, %v1502
        %v1504 = vpop.f32.mrb[0].mxu0
        %1505 = vmatprep.mubr.f32.mxu0 0.0
        %1506 = vmatmul.mubr.f32.gmra.mrb[0].mxu0 %v1115
        %v1507 = vpop.f32.mrb[0].mxu0
        %v1508 = vadd.f32 0.0, %v1507
        %v1509 = vpop.f32.mrb[0].mxu0
        %1510 = vmatprep.mubr.f32.mxu0 0.0
        %1511 = vmatmul.mubr.f32.gmra.mrb[0].mxu0 %v1116
        %v1512 = vpop.f32.mrb[0].mxu0
        %v1513 = vadd.f32 0.0, %v1512
        %v1514 = vpop.f32.mrb[0].mxu0
        %1515 = vmatprep.mubr.f32.mxu0 0.0
        %1516 = vmatmul.mubr.f32.gmra.mrb[0].mxu0 %v1117
        %v1517 = vpop.f32.mrb[0].mxu0
        %v1518 = vadd.f32 0.0, %v1517
        %v1519 = vpop.f32.mrb[0].mxu0
        %1520 = vmatprep.mubr.f32.mxu0 0.0
        %1521 = vmatmul.mubr.f32.gmra.mrb[0].mxu0 %v1118
        %v1522 = vpop.f32.mrb[0].mxu0
        %v1523 = vadd.f32 0.0, %v1522
        %v1524 = vpop.f32.mrb[0].mxu0
        %1525 = vmatprep.mubr.f32.mxu0 0.0
        %1526 = vmatmul.mubr.f32.gmra.mrb[0].mxu0 %v1119
        %v1527 = vpop.f32.mrb[0].mxu0
        %v1528 = vadd.f32 0.0, %v1527
        %v1529 = vpop.f32.mrb[0].mxu0
        %1530 = vmatprep.mubr.f32.mxu0 0.0
        %1531 = vmatmul.mubr.f32.gmra.mrb[0].mxu0 %v1120
        %v1532 = vpop.f32.mrb[0].mxu0
        %v1533 = vadd.f32 0.0, %v1532
        %v1534 = vpop.f32.mrb[0].mxu0
        %1535 = vmatprep.mubr.f32.mxu0 0.0
        %1536 = vmatmul.mubr.f32.gmra.mrb[0].mxu0 %v1121
        %v1537 = vpop.f32.mrb[0].mxu0
        %v1538 = vadd.f32 0.0, %v1537
        %v1539 = vpop.f32.mrb[0].mxu0
        %1540 = vmatprep.mubr.f32.mxu0 0.0
        %1541 = vmatmul.mubr.f32.gmra.mrb[0].mxu0 %v1122
        %v1542 = vpop.f32.mrb[0].mxu0
        %v1543 = vadd.f32 0.0, %v1542
        %v1544 = vpop.f32.mrb[0].mxu0
        %1545 = vmatprep.mubr.f32.mxu0 0.0
        %1546 = vmatmul.mubr.f32.gmra.mrb[0].mxu0 %v1123
        %v1547 = vpop.f32.mrb[0].mxu0
        %v1548 = vadd.f32 0.0, %v1547
        %v1549 = vpop.f32.mrb[0].mxu0
        %1550 = vmatprep.mubr.f32.mxu0 0.0
        %1551 = vmatmul.mubr.f32.gmra.mrb[0].mxu0 %v1124
        %v1552 = vpop.f32.mrb[0].mxu0
        %v1553 = vadd.f32 0.0, %v1552
        %v1554 = vpop.f32.mrb[0].mxu0
        %1555 = vmatprep.mubr.f32.mxu0 0.0
        %1556 = vmatmul.mubr.f32.gmra.mrb[0].mxu0 %v1125
        %v1557 = vpop.f32.mrb[0].mxu0
        %v1558 = vadd.f32 0.0, %v1557
        %v1559 = vpop.f32.mrb[0].mxu0
        %1560 = vmatprep.mubr.f32.mxu0 0.0
        %1561 = vmatmul.mubr.f32.gmra.mrb[0].mxu0 %v1126
        %v1562 = vpop.f32.mrb[0].mxu0
        %v1563 = vadd.f32 0.0, %v1562
        %v1564 = vpop.f32.mrb[0].mxu0
        %1565 = vmatprep.mubr.f32.mxu0 0.0
        %1566 = vmatmul.mubr.f32.gmra.mrb[0].mxu0 %v1127
        %v1567 = vpop.f32.mrb[0].mxu0
        %v1568 = vadd.f32 0.0, %v1567
        %v1569 = vpop.f32.mrb[0].mxu0
        %1570 = vmatprep.mubr.f32.mxu0 0.0
        %1571 = vmatmul.mubr.f32.gmra.mrb[0].mxu0 %v1128
        %v1572 = vpop.f32.mrb[0].mxu0
        %v1573 = vadd.f32 0.0, %v1572
        %v1574 = vpop.f32.mrb[0].mxu0
        %1575 = vdwg.mxu0
        %s1576 = scalar_lea.vmem %s372, 16 [#allocation2]
        %1577 = vst [vmem:[%s1576] sm:$0xff] %v1428
        %1578 = vst [vmem:[%s1576 + $0x8] sm:$0xff] %v1430
        %s1579 = scalar_lea.vmem %s415, 128
        %1580 = vst.msk [vmem:[%s1579] sm:$0xff] %vm1044, %v1498
        %1581 = vst.msk [vmem:[%s1579 + $0x8] sm:$0xff] %vm1044, %v1503
        %1582 = vst.msk [vmem:[%s1579 + $0x10] sm:$0xff] %vm1044, %v1508
        %1583 = vst.msk [vmem:[%s1579 + $0x18] sm:$0xff] %vm1044, %v1513
        %1584 = vst.msk [vmem:[%s1579 + $0x20] sm:$0xff] %vm1044, %v1518
        %1585 = vst.msk [vmem:[%s1579 + $0x28] sm:$0xff] %vm1044, %v1523
        %1586 = vst.msk [vmem:[%s1579 + $0x30] sm:$0xff] %vm1044, %v1528
        %1587 = vst.msk [vmem:[%s1579 + $0x38] sm:$0xff] %vm1044, %v1533
        %1588 = vst.msk [vmem:[%s1579 + $0x40] sm:$0xff] %vm1044, %v1538
        %1589 = vst.msk [vmem:[%s1579 + $0x48] sm:$0xff] %vm1044, %v1543
        %1590 = vst.msk [vmem:[%s1579 + $0x50] sm:$0xff] %vm1044, %v1548
        %1591 = vst.msk [vmem:[%s1579 + $0x58] sm:$0xff] %vm1044, %v1553
        %1592 = vst.msk [vmem:[%s1579 + $0x60] sm:$0xff] %vm1044, %v1558
        %1593 = vst.msk [vmem:[%s1579 + $0x68] sm:$0xff] %vm1044, %v1563
        %1594 = vst.msk [vmem:[%s1579 + $0x70] sm:$0xff] %vm1044, %v1568
        %1595 = vst.msk [vmem:[%s1579 + $0x78] sm:$0xff] %vm1044, %v1573
        %s1596 = smul.u32 2, %s26
        %p1597 = scmp.lt.s32.totalorder %s1596, 3
        %s1598 = scalar_select %p1597, %s1596, 3
        %p1599 = scmp.lt.s32.totalorder %s27, 0
        %s1600 = scalar_select %p1599, %s27, 0
        %s1601 = smul.addr %s1598, 16
        %s1602 = sadd.s32 %s1600, %s1601
        %s1603 = smul.addr %s1602, 8
        %s1604 = scalar_lea.vmem %s6, %s1603
        %s1605 = sand.u32 %s222, 1
        %s1606 = scalar_lea.sflag [#allocation3], %s1605
        %s1607 = sand.u32 %s222, 1
        %s1608 = smul.addr %s1607, 32
        %s1609 = scalar_lea.vmem [#allocation2], %s1608
        // Predicated region
        $region45: #{tpu_custom_call.1} parent=43 // pred_check
          %p1610 = pneg %p204
        $region46: #{tpu_custom_call.1} parent=43 // pred_check_branch
          %1612 = sbr.rel (%p1610) target = $region48
        $region47: #{tpu_custom_call.1} parent=43 // pred_region
          %s1613 = smul.u32 2, %s26
        $region48: #{tpu_custom_call.1} parent=43 // pred_fallthru
          _
        // Predicated region
        $region49: #{tpu_custom_call.1} parent=43 // pred_check
          %p1614 = pneg %p232
        $region50: #{tpu_custom_call.1} parent=43 // pred_check_branch
          %1616 = sbr.rel (%p1614) target = $region52
        $region51: #{tpu_custom_call.1} parent=43 // pred_region
          %s1617 = smul.u32 2, %s26
          %s1618 = smul.u32 2, %s27
          %s1620 = ssub.s32 512, 512
          %1621 = vsyncadd %s1606, %s1620
          %s1622 = smul.addr %s1617, 2
          %s1623 = sadd.s32 %s1618, %s1622
          %s1624 = smul.addr %s1623, 128
          %s1625 = scalar_lea.hbm %s7, %s1624
          %s1626 = sshll.u32 %s1609, 4
          %s1627 = int_to_ptr.vmem [resolvable:$true] %s1626
          %1632 = dma.vmem_to_hbm [thread:$0]  %s1627, 512, %s1625, %s1606, 128, 128, 8
        $region52: #{tpu_custom_call.1} parent=43 // pred_fallthru
          _
      $region44: #{tpu_custom_call.1} parent=5 // pred_fallthru
        _
      %p1633 = scmp.le.s32.totalorder 2, %s17
      // Predicated region
      $region53: #{tpu_custom_call.1} parent=5 // pred_check
        %p1634 = pneg %p1633
      $region54: #{tpu_custom_call.1} parent=5 // pred_check_branch
        %1636 = sbr.rel (%p1634) target = $region56
      $region55: #{tpu_custom_call.1} parent=5 // pred_region
        %s1637 = ssub.s32 %s17, 2
        // Predicated region
        $region57: #{tpu_custom_call.1} parent=55 // pred_check
          %p1638 = pneg %p210
        $region58: #{tpu_custom_call.1} parent=55 // pred_check_branch
          %1640 = sbr.rel (%p1638) target = $region60
        $region59: #{tpu_custom_call.1} parent=55 // pred_region
          %s1641 = smul.u32 2, %s28
          %p1642 = scmp.lt.s32.totalorder %s1641, 3
          %s1643 = scalar_select %p1642, %s1641, 3
          %p1644 = scmp.lt.s32.totalorder %s29, 0
          %s1645 = scalar_select %p1644, %s29, 0
          %s1646 = smul.addr %s1643, 16
          %s1647 = sadd.s32 %s1645, %s1646
          %s1648 = smul.addr %s1647, 8
          %s1649 = scalar_lea.vmem %s6, %s1648
        $region60: #{tpu_custom_call.1} parent=55 // pred_fallthru
          _
        // Predicated region
        $region61: #{tpu_custom_call.1} parent=55 // pred_check
          %p1650 = pneg %p238
        $region62: #{tpu_custom_call.1} parent=55 // pred_check_branch
          %1652 = sbr.rel (%p1650) target = $region64
        $region63: #{tpu_custom_call.1} parent=55 // pred_region
          %s1653 = sand.u32 %s223, 1
          %s1654 = scalar_lea.sflag [#allocation3], %s1653
          %s1655 = sand.u32 %s223, 1
          %s1656 = smul.addr %s1655, 32
          %s1657 = scalar_lea.vmem [#allocation2], %s1656
          %1658 = dma.done %s1654, 512
        $region64: #{tpu_custom_call.1} parent=55 // pred_fallthru
          _
      $region56: #{tpu_custom_call.1} parent=5 // pred_fallthru
        _
    $region6: #{tpu_custom_call.1} parent=1 // loop_footer
      %s21 = sadd.s32 1, %s17
    $region7: #{tpu_custom_call.1} parent=1 // loop_footer_branch
      %16 = sbr.rel target = $region3
    $region8: #{tpu_custom_call.1} parent=1 // loop_exit
      _
    %1659 = vsyncpa [#allocation3], 1
    %s1660 = scalar_lea.sflag [#allocation3], 1
    %1661 = vsyncpa %s1660, 1

</llo_original>
